<compile_context>
chip_gen: v7x
topology: tpu7x:2x2x1
jax: 0.10.0
libtpu: 0.0.40
codegen_flags: <defaults>
</compile_context>

<pallas_src>
import jax
import jax.numpy as jnp
from jax.experimental import pallas as pl
from jax.experimental.pallas import tpu as pltpu

STATE_DIM = 8     # LunarLander-v3 observation dim
ACTION_DIM = 4    # LunarLander-v3 action dim
H1, H2, H3 = 256, 256, 128


def qnet_kernel(x_ref, w1_ref, b1_ref, w2_ref, b2_ref,
                w3_ref, b3_ref, w4_ref, b4_ref, o_ref):
    # Fused 4-layer MLP for one batch tile. bf16 operands on the MXU, f32
    # accumulation (preferred_element_type), bias-add + ReLU on the f32
    # accumulator, re-cast to bf16 between layers to keep vreg pressure low.
    x = x_ref[...].astype(jnp.bfloat16)   # in-kernel cast: saves an HBM pass over x
    h = jnp.dot(x, w1_ref[...], preferred_element_type=jnp.float32) + b1_ref[...]
    h = jnp.maximum(h, 0.0).astype(jnp.bfloat16)
    h = jnp.dot(h, w2_ref[...], preferred_element_type=jnp.float32) + b2_ref[...]
    h = jnp.maximum(h, 0.0).astype(jnp.bfloat16)
    h = jnp.dot(h, w3_ref[...], preferred_element_type=jnp.float32) + b3_ref[...]
    h = jnp.maximum(h, 0.0).astype(jnp.bfloat16)
    y = jnp.dot(h, w4_ref[...], preferred_element_type=jnp.float32) + b4_ref[...]
    o_ref[...] = y.astype(o_ref.dtype)    # narrow (bt, 4) bf16 store: 8 B/row writeback


def prepare_params(params):
    """One-time (per parameter update) conversion to kernel-ready layout.

    Hoists the bf16 weight casts / f32 bias casts out of the per-call forward
    path (perf feedback: the casts cost more HBM traffic than the kernel
    itself at DQN-sized batches). Call this once after each optimizer step,
    reuse the result for every forward until the params change.
    """
    prepped = []
    for w, b in params:
        prepped.append((jnp.asarray(w, jnp.bfloat16),
                        jnp.asarray(b, jnp.float32).reshape(1, -1)))
    return tuple(prepped)


def _pick_batch_tile(B):
    """Tile heuristic: >=2 grid steps whenever B > 128 (keeps both v7x
    TensorCores busy), tiles >= 128 rows and <= 512 rows so the ~0.35 us/step
    grid overhead stays amortized on single-core v5e/v6e too."""
    b8 = ((B + 7) // 8) * 8               # rows rounded to a sublane multiple
    if b8 <= 128:
        return b8                          # splitting tiny batches is pure overhead
    half = ((b8 + 15) // 16) * 8           # ceil(b8/2) rounded up to a multiple of 8
    return min(512, max(128, half))


def qnetwork_forward(x, prepped_params, *, batch_tile=None):
    """x: [B, STATE_DIM] float32, prepped_params from prepare_params()
    -> [B, ACTION_DIM] float32."""
    (w1, b1), (w2, b2), (w3, b3), (w4, b4) = prepped_params
    B, S = x.shape
    assert S == STATE_DIM
    if batch_tile is None:
        batch_tile = _pick_batch_tile(B)

    # Ragged batch support: pad rows (in f32) up to a multiple of batch_tile.
    n_tiles = pl.cdiv(B, batch_tile)
    b_pad = n_tiles * batch_tile
    x_in = x.astype(jnp.float32)
    if b_pad != B:
        x_in = jnp.pad(x_in, ((0, b_pad - B), (0, 0)))

    def full(shape):
        # Invariant block: same block index every grid step -> not re-DMA'd.
        return pl.BlockSpec(shape, lambda i: (0,) * len(shape))

    # Advisory cost estimate with the REAL 4-wide last layer (no padded work).
    flops = 2 * b_pad * (STATE_DIM * H1 + H1 * H2 + H2 * H3 + H3 * ACTION_DIM)
    weight_bytes = (2 * (STATE_DIM * H1 + H1 * H2 + H2 * H3 + H3 * ACTION_DIM)
                    + 4 * (H1 + H2 + H3 + ACTION_DIM))
    bytes_accessed = weight_bytes + b_pad * (STATE_DIM * 4 + ACTION_DIM * 2)

    out = pl.pallas_call(
        qnet_kernel,
        out_shape=jax.ShapeDtypeStruct((b_pad, ACTION_DIM), jnp.bfloat16),
        grid=(n_tiles,),
        in_specs=[
            pl.BlockSpec((batch_tile, STATE_DIM), lambda i: (i, 0)),  # x tile (f32)
            full(w1.shape), full(b1.shape),
            full(w2.shape), full(b2.shape),
            full(w3.shape), full(b3.shape),
            full(w4.shape), full(b4.shape),
        ],
        out_specs=pl.BlockSpec((batch_tile, ACTION_DIM), lambda i: (i, 0)),
        compiler_params=pltpu.CompilerParams(
            dimension_semantics=("parallel",)),
        cost_estimate=pl.CostEstimate(
            flops=flops, transcendentals=0, bytes_accessed=bytes_accessed),
    )(x_in, w1, b1, w2, b2, w3, b3, w4, b4)

    # Drop batch padding; callers (DQN loss / argmax) get f32 back.
    return out[:B].astype(jnp.float32)


def init_params(key):
    """Deterministic synthetic init, PyTorch-Linear-style uniform bounds."""
    def linear(key, fan_in, fan_out):
        kw, kb = jax.random.split(key)
        bound = 1.0 / jnp.sqrt(fan_in)
        # stored as [in, out] (pre-transposed relative to torch's [out, in])
        w = jax.random.uniform(kw, (fan_in, fan_out), jnp.float32, -bound, bound)
        b = jax.random.uniform(kb, (fan_out,), jnp.float32, -bound, bound)
        return w, b

    k1, k2, k3, k4 = jax.random.split(key, 4)
    return (
        linear(k1, STATE_DIM, H1),
        linear(k2, H1, H2),
        linear(k3, H2, H3),
        linear(k4, H3, ACTION_DIM),
    )


def qnetwork_ref(x, params):
    """Pure-JAX reference mirroring the kernel's bf16-operand / f32-accum math
    (including the final bf16 output store)."""
    (w1, b1), (w2, b2), (w3, b3), (w4, b4) = params

    def lin(h, w, b):
        return jnp.dot(h.astype(jnp.bfloat16), w.astype(jnp.bfloat16),
                       preferred_element_type=jnp.float32) + b.reshape(1, -1)

    h = jnp.maximum(lin(x, w1, b1), 0.0)
    h = jnp.maximum(lin(h, w2, b2), 0.0)
    h = jnp.maximum(lin(h, w3, b3), 0.0)
    y = lin(h, w4, b4)
    return y.astype(jnp.bfloat16).astype(jnp.float32)


if __name__ == "__main__":
    key = jax.random.PRNGKey(0)
    kp, kx = jax.random.split(key)

    params = init_params(kp)
    kernel_params = prepare_params(params)   # hoisted prep: once per param update

    # Ragged batch (not a multiple of the tile) to exercise the padding path;
    # batch_tile heuristic gives 2 grid steps -> both v7x TensorCores get work.
    batch = 300
    x = jax.random.normal(kx, (batch, STATE_DIM), jnp.float32)

    out = qnetwork_forward(x, kernel_params)
    out = jax.block_until_ready(out)

    ref = qnetwork_ref(x, params)
    assert out.shape == (batch, ACTION_DIM)
    assert jnp.allclose(out, ref, atol=2e-2, rtol=2e-2), "mismatch vs JAX reference"

    print("KERNEL_OK")
</pallas_src>

<mosaic_0001>
module attributes {stable_mosaic.version = 11 : i64} {
  func.func @qnet_kernel(%arg0: i32, %arg1: memref<152x8xf32, #tpu.memory_space<vmem>>, %arg2: memref<8x256xbf16, #tpu.memory_space<vmem>>, %arg3: memref<1x256xf32, #tpu.memory_space<vmem>>, %arg4: memref<256x256xbf16, #tpu.memory_space<vmem>>, %arg5: memref<1x256xf32, #tpu.memory_space<vmem>>, %arg6: memref<256x128xbf16, #tpu.memory_space<vmem>>, %arg7: memref<1x128xf32, #tpu.memory_space<vmem>>, %arg8: memref<128x4xbf16, #tpu.memory_space<vmem>>, %arg9: memref<1x4xf32, #tpu.memory_space<vmem>>, %arg10: memref<152x4xbf16, #tpu.memory_space<vmem>>) attributes {dimension_semantics = [#tpu.dimension_semantics<parallel>], iteration_bounds = array<i64: 2>, scalar_prefetch = 0 : i64, scratch_operands = 0 : i64, tpu.core_type = #tpu.core_type<tc>, window_params = [{transform_indices = @transform_0, window_bounds = array<i64: 152, 8>}, {pipeline_mode = #tpu.pipeline_mode<synchronous>, transform_indices = @transform_1, window_bounds = array<i64: 8, 256>}, {pipeline_mode = #tpu.pipeline_mode<synchronous>, transform_indices = @transform_2, window_bounds = array<i64: 1, 256>}, {pipeline_mode = #tpu.pipeline_mode<synchronous>, transform_indices = @transform_3, window_bounds = array<i64: 256, 256>}, {pipeline_mode = #tpu.pipeline_mode<synchronous>, transform_indices = @transform_4, window_bounds = array<i64: 1, 256>}, {pipeline_mode = #tpu.pipeline_mode<synchronous>, transform_indices = @transform_5, window_bounds = array<i64: 256, 128>}, {pipeline_mode = #tpu.pipeline_mode<synchronous>, transform_indices = @transform_6, window_bounds = array<i64: 1, 128>}, {pipeline_mode = #tpu.pipeline_mode<synchronous>, transform_indices = @transform_7, window_bounds = array<i64: 128, 4>}, {pipeline_mode = #tpu.pipeline_mode<synchronous>, transform_indices = @transform_8, window_bounds = array<i64: 1, 4>}, {transform_indices = @transform_9, window_bounds = array<i64: 152, 4>}]} {
    %c0 = arith.constant 0 : index
    %c0_0 = arith.constant 0 : index
    %0 = vector.load %arg1[%c0, %c0_0] : memref<152x8xf32, #tpu.memory_space<vmem>>, vector<152x8xf32>
    %1 = arith.truncf %0 : vector<152x8xf32> to vector<152x8xbf16>
    %c0_1 = arith.constant 0 : index
    %c0_2 = arith.constant 0 : index
    %2 = vector.load %arg2[%c0_1, %c0_2] : memref<8x256xbf16, #tpu.memory_space<vmem>>, vector<8x256xbf16>
    %cst = arith.constant dense<0.000000e+00> : vector<152x256xf32>
    %3 = tpu.matmul %1, %2, %cst {dimension_numbers = #tpu.dot_dimension_numbers<[1], [0], [0], [1], [0, 0, 1, 1], [], []>} : vector<152x8xbf16>, vector<8x256xbf16>, vector<152x256xf32> -> vector<152x256xf32>
    %c0_3 = arith.constant 0 : index
    %c0_4 = arith.constant 0 : index
    %4 = vector.load %arg3[%c0_3, %c0_4] : memref<1x256xf32, #tpu.memory_space<vmem>>, vector<1x256xf32>
    %5 = vector.broadcast %4 : vector<1x256xf32> to vector<152x256xf32>
    %6 = arith.addf %3, %5 : vector<152x256xf32>
    %cst_5 = arith.constant 0.000000e+00 : f32
    %7 = vector.broadcast %cst_5 : f32 to vector<152x256xf32>
    %8 = arith.maximumf %6, %7 : vector<152x256xf32>
    %9 = arith.truncf %8 : vector<152x256xf32> to vector<152x256xbf16>
    %c0_6 = arith.constant 0 : index
    %c0_7 = arith.constant 0 : index
    %10 = vector.load %arg4[%c0_6, %c0_7] : memref<256x256xbf16, #tpu.memory_space<vmem>>, vector<256x256xbf16>
    %cst_8 = arith.constant dense<0.000000e+00> : vector<152x256xf32>
    %11 = tpu.matmul %9, %10, %cst_8 {dimension_numbers = #tpu.dot_dimension_numbers<[1], [0], [0], [1], [0, 0, 1, 1], [], []>} : vector<152x256xbf16>, vector<256x256xbf16>, vector<152x256xf32> -> vector<152x256xf32>
    %c0_9 = arith.constant 0 : index
    %c0_10 = arith.constant 0 : index
    %12 = vector.load %arg5[%c0_9, %c0_10] : memref<1x256xf32, #tpu.memory_space<vmem>>, vector<1x256xf32>
    %13 = vector.broadcast %12 : vector<1x256xf32> to vector<152x256xf32>
    %14 = arith.addf %11, %13 : vector<152x256xf32>
    %cst_11 = arith.constant 0.000000e+00 : f32
    %15 = vector.broadcast %cst_11 : f32 to vector<152x256xf32>
    %16 = arith.maximumf %14, %15 : vector<152x256xf32>
    %17 = arith.truncf %16 : vector<152x256xf32> to vector<152x256xbf16>
    %c0_12 = arith.constant 0 : index
    %c0_13 = arith.constant 0 : index
    %18 = vector.load %arg6[%c0_12, %c0_13] : memref<256x128xbf16, #tpu.memory_space<vmem>>, vector<256x128xbf16>
    %cst_14 = arith.constant dense<0.000000e+00> : vector<152x128xf32>
    %19 = tpu.matmul %17, %18, %cst_14 {dimension_numbers = #tpu.dot_dimension_numbers<[1], [0], [0], [1], [0, 0, 1, 1], [], []>} : vector<152x256xbf16>, vector<256x128xbf16>, vector<152x128xf32> -> vector<152x128xf32>
    %c0_15 = arith.constant 0 : index
    %c0_16 = arith.constant 0 : index
    %20 = vector.load %arg7[%c0_15, %c0_16] : memref<1x128xf32, #tpu.memory_space<vmem>>, vector<1x128xf32>
    %21 = vector.broadcast %20 : vector<1x128xf32> to vector<152x128xf32>
    %22 = arith.addf %19, %21 : vector<152x128xf32>
    %cst_17 = arith.constant 0.000000e+00 : f32
    %23 = vector.broadcast %cst_17 : f32 to vector<152x128xf32>
    %24 = arith.maximumf %22, %23 : vector<152x128xf32>
    %25 = arith.truncf %24 : vector<152x128xf32> to vector<152x128xbf16>
    %c0_18 = arith.constant 0 : index
    %c0_19 = arith.constant 0 : index
    %26 = vector.load %arg8[%c0_18, %c0_19] : memref<128x4xbf16, #tpu.memory_space<vmem>>, vector<128x4xbf16>
    %cst_20 = arith.constant dense<0.000000e+00> : vector<152x4xf32>
    %27 = tpu.matmul %25, %26, %cst_20 {dimension_numbers = #tpu.dot_dimension_numbers<[1], [0], [0], [1], [0, 0, 1, 1], [], []>} : vector<152x128xbf16>, vector<128x4xbf16>, vector<152x4xf32> -> vector<152x4xf32>
    %c0_21 = arith.constant 0 : index
    %c0_22 = arith.constant 0 : index
    %28 = vector.load %arg9[%c0_21, %c0_22] : memref<1x4xf32, #tpu.memory_space<vmem>>, vector<1x4xf32>
    %29 = vector.broadcast %28 : vector<1x4xf32> to vector<152x4xf32>
    %30 = arith.addf %27, %29 : vector<152x4xf32>
    %31 = arith.truncf %30 : vector<152x4xf32> to vector<152x4xbf16>
    %c0_23 = arith.constant 0 : index
    %c0_24 = arith.constant 0 : index
    %32 = vector.load %arg10[%c0_23, %c0_24] : memref<152x4xbf16, #tpu.memory_space<vmem>>, vector<152x4xbf16>
    tpu.vector_store %arg10[%c0_23, %c0_24], %31 {strides = array<i32>} : memref<152x4xbf16, #tpu.memory_space<vmem>>, vector<152x4xbf16>,
    return
  }
  func.func @transform_0(%arg0: i32) -> (i32, i32) {
    %c0_i32 = arith.constant 0 : i32
    %c0_i32_0 = arith.constant 0 : i32
    return %arg0, %c0_i32 : i32, i32
  }
  func.func @transform_1(%arg0: i32) -> (i32, i32) {
    %c0_i32 = arith.constant 0 : i32
    %c0_i32_0 = arith.constant 0 : i32
    %c0_i32_1 = arith.constant 0 : i32
    return %c0_i32, %c0_i32_0 : i32, i32
  }
  func.func @transform_2(%arg0: i32) -> (i32, i32) {
    %c0_i32 = arith.constant 0 : i32
    %c0_i32_0 = arith.constant 0 : i32
    %c0_i32_1 = arith.constant 0 : i32
    return %c0_i32, %c0_i32_0 : i32, i32
  }
  func.func @transform_3(%arg0: i32) -> (i32, i32) {
    %c0_i32 = arith.constant 0 : i32
    %c0_i32_0 = arith.constant 0 : i32
    %c0_i32_1 = arith.constant 0 : i32
    return %c0_i32, %c0_i32_0 : i32, i32
  }
  func.func @transform_4(%arg0: i32) -> (i32, i32) {
    %c0_i32 = arith.constant 0 : i32
    %c0_i32_0 = arith.constant 0 : i32
    %c0_i32_1 = arith.constant 0 : i32
    return %c0_i32, %c0_i32_0 : i32, i32
  }
  func.func @transform_5(%arg0: i32) -> (i32, i32) {
    %c0_i32 = arith.constant 0 : i32
    %c0_i32_0 = arith.constant 0 : i32
    %c0_i32_1 = arith.constant 0 : i32
    return %c0_i32, %c0_i32_0 : i32, i32
  }
  func.func @transform_6(%arg0: i32) -> (i32, i32) {
    %c0_i32 = arith.constant 0 : i32
    %c0_i32_0 = arith.constant 0 : i32
    %c0_i32_1 = arith.constant 0 : i32
    return %c0_i32, %c0_i32_0 : i32, i32
  }
  func.func @transform_7(%arg0: i32) -> (i32, i32) {
    %c0_i32 = arith.constant 0 : i32
    %c0_i32_0 = arith.constant 0 : i32
    %c0_i32_1 = arith.constant 0 : i32
    return %c0_i32, %c0_i32_0 : i32, i32
  }
  func.func @transform_8(%arg0: i32) -> (i32, i32) {
    %c0_i32 = arith.constant 0 : i32
    %c0_i32_0 = arith.constant 0 : i32
    %c0_i32_1 = arith.constant 0 : i32
    return %c0_i32, %c0_i32_0 : i32, i32
  }
  func.func @transform_9(%arg0: i32) -> (i32, i32) {
    %c0_i32 = arith.constant 0 : i32
    %c0_i32_0 = arith.constant 0 : i32
    return %arg0, %c0_i32 : i32, i32
  }
}

</mosaic_0001>

<llo_original>
// kernel: tpu_custom_call.1
$region0: #{tpu_custom_call.1}
  #allocation0 [shape = 'u32[]', space=smem, size = 0x4, offset = 0x4, fixed_abs, tag = 'smem constant byte address 0x4 - core index']
  #allocation1 [shape = 'u32[144,128]{1,0:T(1,128)}', space=vmem, size = 0x12000, scoped, tag = 'internal scratch']
  %s0 = inlined_call_operand.vmem [shape: f32[304,8], index: 0, kind: input, shape index: {}]
  %s1 = inlined_call_operand.vmem [shape: bf16[8,256], index: 1, kind: input, shape index: {}]
  %s2 = inlined_call_operand.vmem [shape: f32[1,256], index: 2, kind: input, shape index: {}]
  %s3 = inlined_call_operand.vmem [shape: bf16[256,256], index: 3, kind: input, shape index: {}]
  %s4 = inlined_call_operand.vmem [shape: f32[1,256], index: 4, kind: input, shape index: {}]
  %s5 = inlined_call_operand.vmem [shape: bf16[256,128], index: 5, kind: input, shape index: {}]
  %s6 = inlined_call_operand.vmem [shape: f32[1,128], index: 6, kind: input, shape index: {}]
  %s7 = inlined_call_operand.vmem [shape: bf16[128,4], index: 7, kind: input, shape index: {}]
  %s8 = inlined_call_operand.vmem [shape: f32[1,4], index: 8, kind: input, shape index: {}]
  %s9 = inlined_call_operand.vmem [shape: bf16[304,4], index: 9, kind: output, shape index: {}]
  %s10 = sld [smem:[#allocation0]]
  $region69: #{tpu_custom_call.1} parent=0
    _
  %s12 = ssub.s32 1, %s10
  %s13 = scalar_select 0, %s12, %s10
  loop: start=0, step=1, limit=4
  $region2: #{tpu_custom_call.1} parent=0 // loop_pre_header
    _
  $region3: #{tpu_custom_call.1} parent=0 // loop_header
    %s15 = sphi 0, %s19
    %p16 = scmp.ge.s32.totalorder %s15, 4
    %s25 = sphi 0, %s27
    %s28 = sphi 0, %s25
    %s29 = sphi 0, %s28
    %s45 = sphi 0, %s29
    %s49 = sphi 0, %s49
    %s51 = sphi 0, %s49
    %s52 = sphi 0, %s51
    %s66 = sphi 0, %s52
    %s70 = sphi 0, %s70
    %s72 = sphi 0, %s70
    %s73 = sphi 0, %s72
    %s87 = sphi 0, %s73
    %s91 = sphi 0, %s91
    %s93 = sphi 0, %s91
    %s94 = sphi 0, %s93
    %s108 = sphi 0, %s94
    %s112 = sphi 0, %s112
    %s114 = sphi 0, %s112
    %s115 = sphi 0, %s114
    %s129 = sphi 0, %s115
    %s133 = sphi 0, %s133
    %s135 = sphi 0, %s133
    %s136 = sphi 0, %s135
    %s150 = sphi 0, %s136
    %s154 = sphi 0, %s154
    %s156 = sphi 0, %s154
    %s157 = sphi 0, %s156
    %s171 = sphi 0, %s157
    %s175 = sphi 0, %s175
    %s177 = sphi 0, %s175
    %s178 = sphi 0, %s177
    %s192 = sphi 0, %s178
    %s196 = sphi 0, %s196
    %s198 = sphi 0, %s196
    %s199 = sphi 0, %s198
    %s213 = sphi 0, %s199
    %s219 = sphi 0, %s221
    %s222 = sphi 0, %s219
    %s223 = sphi 0, %s222
    %s239 = sphi 0, %s223
  $region4: #{tpu_custom_call.1} parent=0 // loop_header_branch
    %18 = sbr.rel (%p16) target = $region8
  $region5: #{tpu_custom_call.1} parent=0 // loop_body
    %s20 = ssub.s32 %s15, 1
    %s21 = ssub.s32 %s15, 2
    %s22 = sadd.s32 %s15, 1
    %s23 = ssub.s32 %s15, %s22
    %p24 = scmp.eq.s32.totalorder %s23, 0
    %s26 = sadd.s32 %s25, 1
    %s27 = scalar_select %p24, %s25, %s26
    %p30 = pneg %p24
    %p31 = scmp.eq.s32.totalorder %s15, 1
    %p32 = por %p30, %p31
    %p33 = scmp.ne.s32.totalorder %s25, %s28
    %p34 = scmp.eq.s32.totalorder %s15, 0
    %p35 = por %p33, %p34
    %p36 = scmp.ne.s32.totalorder %s25, %s28
    %p37 = scmp.eq.s32.totalorder %s20, 1
    %p38 = por %p36, %p37
    %p39 = scmp.ne.s32.totalorder %s28, %s29
    %p40 = scmp.eq.s32.totalorder %s20, 0
    %p41 = por %p39, %p40
    %p42 = scmp.ne.s32.totalorder %s28, %s29
    %p43 = scmp.eq.s32.totalorder %s21, 1
    %p44 = por %p42, %p43
    %p46 = scmp.ne.s32.totalorder %s29, %s45
    %p47 = scmp.eq.s32.totalorder %s21, 0
    %p48 = por %p46, %p47
    %s50 = sadd.s32 %s49, 1
    %p53 = scmp.eq.s32.totalorder %s15, 1
    %p54 = scmp.ne.s32.totalorder %s49, %s51
    %p55 = scmp.eq.s32.totalorder %s15, 0
    %p56 = por %p54, %p55
    %p57 = scmp.ne.s32.totalorder %s49, %s51
    %p58 = scmp.eq.s32.totalorder %s20, 1
    %p59 = por %p57, %p58
    %p60 = scmp.ne.s32.totalorder %s51, %s52
    %p61 = scmp.eq.s32.totalorder %s20, 0
    %p62 = por %p60, %p61
    %p63 = scmp.ne.s32.totalorder %s51, %s52
    %p64 = scmp.eq.s32.totalorder %s21, 1
    %p65 = por %p63, %p64
    %p67 = scmp.ne.s32.totalorder %s52, %s66
    %p68 = scmp.eq.s32.totalorder %s21, 0
    %p69 = por %p67, %p68
    %s71 = sadd.s32 %s70, 1
    %p74 = scmp.eq.s32.totalorder %s15, 1
    %p75 = scmp.ne.s32.totalorder %s70, %s72
    %p76 = scmp.eq.s32.totalorder %s15, 0
    %p77 = por %p75, %p76
    %p78 = scmp.ne.s32.totalorder %s70, %s72
    %p79 = scmp.eq.s32.totalorder %s20, 1
    %p80 = por %p78, %p79
    %p81 = scmp.ne.s32.totalorder %s72, %s73
    %p82 = scmp.eq.s32.totalorder %s20, 0
    %p83 = por %p81, %p82
    %p84 = scmp.ne.s32.totalorder %s72, %s73
    %p85 = scmp.eq.s32.totalorder %s21, 1
    %p86 = por %p84, %p85
    %p88 = scmp.ne.s32.totalorder %s73, %s87
    %p89 = scmp.eq.s32.totalorder %s21, 0
    %p90 = por %p88, %p89
    %s92 = sadd.s32 %s91, 1
    %p95 = scmp.eq.s32.totalorder %s15, 1
    %p96 = scmp.ne.s32.totalorder %s91, %s93
    %p97 = scmp.eq.s32.totalorder %s15, 0
    %p98 = por %p96, %p97
    %p99 = scmp.ne.s32.totalorder %s91, %s93
    %p100 = scmp.eq.s32.totalorder %s20, 1
    %p101 = por %p99, %p100
    %p102 = scmp.ne.s32.totalorder %s93, %s94
    %p103 = scmp.eq.s32.totalorder %s20, 0
    %p104 = por %p102, %p103
    %p105 = scmp.ne.s32.totalorder %s93, %s94
    %p106 = scmp.eq.s32.totalorder %s21, 1
    %p107 = por %p105, %p106
    %p109 = scmp.ne.s32.totalorder %s94, %s108
    %p110 = scmp.eq.s32.totalorder %s21, 0
    %p111 = por %p109, %p110
    %s113 = sadd.s32 %s112, 1
    %p116 = scmp.eq.s32.totalorder %s15, 1
    %p117 = scmp.ne.s32.totalorder %s112, %s114
    %p118 = scmp.eq.s32.totalorder %s15, 0
    %p119 = por %p117, %p118
    %p120 = scmp.ne.s32.totalorder %s112, %s114
    %p121 = scmp.eq.s32.totalorder %s20, 1
    %p122 = por %p120, %p121
    %p123 = scmp.ne.s32.totalorder %s114, %s115
    %p124 = scmp.eq.s32.totalorder %s20, 0
    %p125 = por %p123, %p124
    %p126 = scmp.ne.s32.totalorder %s114, %s115
    %p127 = scmp.eq.s32.totalorder %s21, 1
    %p128 = por %p126, %p127
    %p130 = scmp.ne.s32.totalorder %s115, %s129
    %p131 = scmp.eq.s32.totalorder %s21, 0
    %p132 = por %p130, %p131
    %s134 = sadd.s32 %s133, 1
    %p137 = scmp.eq.s32.totalorder %s15, 1
    %p138 = scmp.ne.s32.totalorder %s133, %s135
    %p139 = scmp.eq.s32.totalorder %s15, 0
    %p140 = por %p138, %p139
    %p141 = scmp.ne.s32.totalorder %s133, %s135
    %p142 = scmp.eq.s32.totalorder %s20, 1
    %p143 = por %p141, %p142
    %p144 = scmp.ne.s32.totalorder %s135, %s136
    %p145 = scmp.eq.s32.totalorder %s20, 0
    %p146 = por %p144, %p145
    %p147 = scmp.ne.s32.totalorder %s135, %s136
    %p148 = scmp.eq.s32.totalorder %s21, 1
    %p149 = por %p147, %p148
    %p151 = scmp.ne.s32.totalorder %s136, %s150
    %p152 = scmp.eq.s32.totalorder %s21, 0
    %p153 = por %p151, %p152
    %s155 = sadd.s32 %s154, 1
    %p158 = scmp.eq.s32.totalorder %s15, 1
    %p159 = scmp.ne.s32.totalorder %s154, %s156
    %p160 = scmp.eq.s32.totalorder %s15, 0
    %p161 = por %p159, %p160
    %p162 = scmp.ne.s32.totalorder %s154, %s156
    %p163 = scmp.eq.s32.totalorder %s20, 1
    %p164 = por %p162, %p163
    %p165 = scmp.ne.s32.totalorder %s156, %s157
    %p166 = scmp.eq.s32.totalorder %s20, 0
    %p167 = por %p165, %p166
    %p168 = scmp.ne.s32.totalorder %s156, %s157
    %p169 = scmp.eq.s32.totalorder %s21, 1
    %p170 = por %p168, %p169
    %p172 = scmp.ne.s32.totalorder %s157, %s171
    %p173 = scmp.eq.s32.totalorder %s21, 0
    %p174 = por %p172, %p173
    %s176 = sadd.s32 %s175, 1
    %p179 = scmp.eq.s32.totalorder %s15, 1
    %p180 = scmp.ne.s32.totalorder %s175, %s177
    %p181 = scmp.eq.s32.totalorder %s15, 0
    %p182 = por %p180, %p181
    %p183 = scmp.ne.s32.totalorder %s175, %s177
    %p184 = scmp.eq.s32.totalorder %s20, 1
    %p185 = por %p183, %p184
    %p186 = scmp.ne.s32.totalorder %s177, %s178
    %p187 = scmp.eq.s32.totalorder %s20, 0
    %p188 = por %p186, %p187
    %p189 = scmp.ne.s32.totalorder %s177, %s178
    %p190 = scmp.eq.s32.totalorder %s21, 1
    %p191 = por %p189, %p190
    %p193 = scmp.ne.s32.totalorder %s178, %s192
    %p194 = scmp.eq.s32.totalorder %s21, 0
    %p195 = por %p193, %p194
    %s197 = sadd.s32 %s196, 1
    %p200 = scmp.eq.s32.totalorder %s15, 1
    %p201 = scmp.ne.s32.totalorder %s196, %s198
    %p202 = scmp.eq.s32.totalorder %s15, 0
    %p203 = por %p201, %p202
    %p204 = scmp.ne.s32.totalorder %s196, %s198
    %p205 = scmp.eq.s32.totalorder %s20, 1
    %p206 = por %p204, %p205
    %p207 = scmp.ne.s32.totalorder %s198, %s199
    %p208 = scmp.eq.s32.totalorder %s20, 0
    %p209 = por %p207, %p208
    %p210 = scmp.ne.s32.totalorder %s198, %s199
    %p211 = scmp.eq.s32.totalorder %s21, 1
    %p212 = por %p210, %p211
    %p214 = scmp.ne.s32.totalorder %s199, %s213
    %p215 = scmp.eq.s32.totalorder %s21, 0
    %p216 = por %p214, %p215
    %s217 = ssub.s32 %s15, %s22
    %p218 = scmp.eq.s32.totalorder %s217, 0
    %s220 = sadd.s32 %s219, 1
    %s221 = scalar_select %p218, %s219, %s220
    %p224 = pneg %p218
    %p225 = scmp.eq.s32.totalorder %s15, 1
    %p226 = por %p224, %p225
    %p227 = scmp.ne.s32.totalorder %s219, %s222
    %p228 = scmp.eq.s32.totalorder %s15, 0
    %p229 = por %p227, %p228
    %p230 = scmp.ne.s32.totalorder %s219, %s222
    %p231 = scmp.eq.s32.totalorder %s20, 1
    %p232 = por %p230, %p231
    %p233 = scmp.ne.s32.totalorder %s222, %s223
    %p234 = scmp.eq.s32.totalorder %s20, 0
    %p235 = por %p233, %p234
    %p236 = scmp.ne.s32.totalorder %s222, %s223
    %p237 = scmp.eq.s32.totalorder %s21, 1
    %p238 = por %p236, %p237
    %p240 = scmp.ne.s32.totalorder %s223, %s239
    %p241 = scmp.eq.s32.totalorder %s21, 0
    %p242 = por %p240, %p241
    %p243 = scmp.le.s32.totalorder 1, %s15
    %p244 = scmp.lt.s32.totalorder %s15, 3
    %p245 = pnand %p243, %p244
    %p246 = pneg %p245
    // Predicated region
    $region9: #{tpu_custom_call.1} parent=5 // pred_check
      _
    $region10: #{tpu_custom_call.1} parent=5 // pred_check_branch
      %248 = sbr.rel (%p245) target = $region12
    $region11: #{tpu_custom_call.1} parent=5 // pred_region
      %s249 = ssub.s32 %s15, 1
      // Predicated region
      $region13: #{tpu_custom_call.1} parent=11 // pred_check
        %p250 = pneg %p62
      $region14: #{tpu_custom_call.1} parent=11 // pred_check_branch
        %252 = sbr.rel (%p250) target = $region16
      $region15: #{tpu_custom_call.1} parent=11 // pred_region
        _
      $region16: #{tpu_custom_call.1} parent=11 // pred_fallthru
        _
      // Predicated region
      $region17: #{tpu_custom_call.1} parent=11 // pred_check
        %p253 = pneg %p83
      $region18: #{tpu_custom_call.1} parent=11 // pred_check_branch
        %255 = sbr.rel (%p253) target = $region20
      $region19: #{tpu_custom_call.1} parent=11 // pred_region
        _
      $region20: #{tpu_custom_call.1} parent=11 // pred_fallthru
        _
      // Predicated region
      $region21: #{tpu_custom_call.1} parent=11 // pred_check
        %p256 = pneg %p104
      $region22: #{tpu_custom_call.1} parent=11 // pred_check_branch
        %258 = sbr.rel (%p256) target = $region24
      $region23: #{tpu_custom_call.1} parent=11 // pred_region
        _
      $region24: #{tpu_custom_call.1} parent=11 // pred_fallthru
        _
      // Predicated region
      $region25: #{tpu_custom_call.1} parent=11 // pred_check
        %p259 = pneg %p125
      $region26: #{tpu_custom_call.1} parent=11 // pred_check_branch
        %261 = sbr.rel (%p259) target = $region28
      $region27: #{tpu_custom_call.1} parent=11 // pred_region
        _
      $region28: #{tpu_custom_call.1} parent=11 // pred_fallthru
        _
      // Predicated region
      $region29: #{tpu_custom_call.1} parent=11 // pred_check
        %p262 = pneg %p146
      $region30: #{tpu_custom_call.1} parent=11 // pred_check_branch
        %264 = sbr.rel (%p262) target = $region32
      $region31: #{tpu_custom_call.1} parent=11 // pred_region
        _
      $region32: #{tpu_custom_call.1} parent=11 // pred_fallthru
        _
      // Predicated region
      $region33: #{tpu_custom_call.1} parent=11 // pred_check
        %p265 = pneg %p167
      $region34: #{tpu_custom_call.1} parent=11 // pred_check_branch
        %267 = sbr.rel (%p265) target = $region36
      $region35: #{tpu_custom_call.1} parent=11 // pred_region
        _
      $region36: #{tpu_custom_call.1} parent=11 // pred_fallthru
        _
      // Predicated region
      $region37: #{tpu_custom_call.1} parent=11 // pred_check
        %p268 = pneg %p188
      $region38: #{tpu_custom_call.1} parent=11 // pred_check_branch
        %270 = sbr.rel (%p268) target = $region40
      $region39: #{tpu_custom_call.1} parent=11 // pred_region
        _
      $region40: #{tpu_custom_call.1} parent=11 // pred_fallthru
        _
      // Predicated region
      $region41: #{tpu_custom_call.1} parent=11 // pred_check
        %p271 = pneg %p209
      $region42: #{tpu_custom_call.1} parent=11 // pred_check_branch
        %273 = sbr.rel (%p271) target = $region44
      $region43: #{tpu_custom_call.1} parent=11 // pred_region
        _
      $region44: #{tpu_custom_call.1} parent=11 // pred_fallthru
        _
    $region12: #{tpu_custom_call.1} parent=5 // pred_fallthru
      _
    %p274 = scmp.lt.s32.totalorder %s15, 2
    // Predicated region
    $region45: #{tpu_custom_call.1} parent=5 // pred_check
      %p275 = pneg %p274
    $region46: #{tpu_custom_call.1} parent=5 // pred_check_branch
      %277 = sbr.rel (%p275) target = $region48
    $region47: #{tpu_custom_call.1} parent=5 // pred_region
      // Predicated region
      $region49: #{tpu_custom_call.1} parent=47 // pred_check
        %p278 = pneg %p35
      $region50: #{tpu_custom_call.1} parent=47 // pred_check_branch
        %280 = sbr.rel (%p278) target = $region52
      $region51: #{tpu_custom_call.1} parent=47 // pred_region
        %s281 = smul.u32 19, %s15
        %p282 = scmp.lt.s32.totalorder %s281, 37
        %s283 = scalar_select %p282, %s281, 37
        %s284 = smul.addr %s283, 8
        %s285 = scalar_lea.vmem %s0, %s284
        %s286 = smul.u32 19, %s15
      $region52: #{tpu_custom_call.1} parent=47 // pred_fallthru
        _
    $region48: #{tpu_custom_call.1} parent=5 // pred_fallthru
      _
    %p287 = scmp.le.s32.totalorder 1, %s15
    %p288 = scmp.lt.s32.totalorder %s15, 3
    %p289 = pnand %p287, %p288
    %p290 = pneg %p289
    // Predicated region
    $region53: #{tpu_custom_call.1} parent=5 // pred_check
      _
    $region54: #{tpu_custom_call.1} parent=5 // pred_check_branch
      %292 = sbr.rel (%p289) target = $region56
    $region55: #{tpu_custom_call.1} parent=5 // pred_region
      %s293 = ssub.s32 %s15, 1
      %s294 = smul.u32 19, %s20
      %p295 = scmp.lt.s32.totalorder %s294, 37
      %s296 = scalar_select %p295, %s294, 37
      %s297 = smul.addr %s296, 8
      %s298 = scalar_lea.vmem %s0, %s297
      %p299 = pneg %p41
      %p300 = pneg %p38
      %p301 = pneg %p62
      %p302 = pneg %p59
      %p303 = pneg %p83
      %p304 = pneg %p80
      %p305 = pneg %p104
      %p306 = pneg %p101
      %p307 = pneg %p125
      %p308 = pneg %p122
      %p309 = pneg %p146
      %p310 = pneg %p143
      %p311 = pneg %p167
      %p312 = pneg %p164
      %p313 = pneg %p188
      %p314 = pneg %p185
      %p315 = pneg %p209
      %p316 = pneg %p206
      %p317 = pneg %p235
      %p318 = pneg %p232
      %s319 = smul.u32 19, %s20
      %p320 = scmp.lt.s32.totalorder %s319, 37
      %s321 = scalar_select %p320, %s319, 37
      %s322 = smul.addr %s321, 4
      %s323 = scalar_lea.vmem %s9, %s322
      %s324 = smul.u32 19, %s20
      %p325 = scmp.lt.s32.totalorder %s324, 37
      %s326 = scalar_select %p325, %s324, 37
      %s327 = smul.addr %s326, 8
      %s328 = scalar_lea.vmem %s0, %s327
      %s329 = smul.u32 19, %s20
      %s330 = smul.u32 19, %s20
      %p331 = scmp.lt.s32.totalorder %s330, 37
      %s332 = scalar_select %p331, %s330, 37
      %s333 = smul.addr %s332, 4
      %s334 = scalar_lea.vmem %s9, %s333
      %s335 = smul.u32 19, %s20
      %v337 = vld [vmem:[%s328] sm:$0xff]
      %v338 = vld [vmem:[%s328 + $0x8] sm:$0xff]
      %v339 = vld [vmem:[%s328 + $0x10] sm:$0xff]
      %v340 = vld [vmem:[%s328 + $0x18] sm:$0xff]
      %v341 = vld [vmem:[%s328 + $0x20] sm:$0xff]
      %v342 = vld [vmem:[%s328 + $0x28] sm:$0xff]
      %v343 = vld [vmem:[%s328 + $0x30] sm:$0xff]
      %v344 = vld [vmem:[%s328 + $0x38] sm:$0xff]
      %v345 = vld [vmem:[%s328 + $0x40] sm:$0xff]
      %v346 = vld [vmem:[%s328 + $0x48] sm:$0xff]
      %v347 = vld [vmem:[%s328 + $0x50] sm:$0xff]
      %v348 = vld [vmem:[%s328 + $0x58] sm:$0xff]
      %v349 = vld [vmem:[%s328 + $0x60] sm:$0xff]
      %v350 = vld [vmem:[%s328 + $0x68] sm:$0xff]
      %v351 = vld [vmem:[%s328 + $0x70] sm:$0xff]
      %v352 = vld [vmem:[%s328 + $0x78] sm:$0xff]
      %v353 = vld [vmem:[%s328 + $0x80] sm:$0xff]
      %v354 = vld [vmem:[%s328 + $0x88] sm:$0xff]
      %v355 = vld [vmem:[%s328 + $0x90] sm:$0xff]
      %v356 = vpack.c.bf16 %v338, %v337
      %v357 = vpack.c.bf16 %v340, %v339
      %v358 = vpack.c.bf16 %v342, %v341
      %v359 = vpack.c.bf16 %v344, %v343
      %v360 = vpack.c.bf16 %v346, %v345
      %v361 = vpack.c.bf16 %v348, %v347
      %v362 = vpack.c.bf16 %v350, %v349
      %v363 = vpack.c.bf16 %v352, %v351
      %v364 = vpack.c.bf16 %v354, %v353
      %v365 = vpack.c.bf16 %v355, %v355
      %v366 = vld [vmem:[%s1] sm:$0xff]
      %v367 = vld [vmem:[%s2] sm:$0x3]
      %v369 = vlaneseq
      %v370 = vshrl.u32 %v369, 7
      %v371 = vsub.s32 0, %v370
      %v372 = vrot.slane %v367, %v371
      %v373 = vlaneseq
      %v374 = vshrl.u32 %v373, 7
      %v375 = vsub.s32 1, %v374
      %v376 = vrot.slane %v367, %v375
      %v380 = vunpack.c.l.b16 %v366
      %v381 = vunpack.c.h.b16 %v366
      %v382 = vpack.c.b16 %v380, %v380
      %v383 = vpack.c.b16 %v381, %v381
      %vm384 = vcmask 64512
      %v386 = vsel %vm384, %v356, 0
      %v389 = vsel %vm384, %v357, 0
      %v392 = vsel %vm384, %v358, 0
      %v395 = vsel %vm384, %v359, 0
      %v398 = vsel %vm384, %v360, 0
      %v401 = vsel %vm384, %v361, 0
      %v404 = vsel %vm384, %v362, 0
      %v407 = vsel %vm384, %v363, 0
      %v410 = vsel %vm384, %v364, 0
      %v413 = vsel %vm384, %v365, 0
      %vm415 = vcmask 1043456
      %v417 = vsel %vm415, %v382, 0
      %v420 = vsel %vm415, %v383, 0
      %422 = vmatprep.subr.bf16.mxu0 %v420
      %423 = vmatpush1.bf16.msra.mxu0 %v417
      %424 = vmatprep.subr.bf16.mxu0 0
      %425 = vmatpush1.bf16.msra.mxu0 0
      %426 = vmatprep.subr.bf16.mxu0 0
      %427 = vmatpush1.bf16.msra.mxu0 0
      %428 = vmatprep.subr.bf16.mxu0 0
      %429 = vmatpush1.bf16.msra.mxu0 0
      %430 = vmatprep.subr.bf16.mxu0 0
      %431 = vmatpush1.bf16.msra.mxu0 0
      %432 = vmatprep.subr.bf16.mxu0 0
      %433 = vmatpush1.bf16.msra.mxu0 0
      %434 = vmatprep.subr.bf16.mxu0 0
      %435 = vmatpush1.bf16.msra.mxu0 0
      %436 = vmatprep.subr.bf16.mxu0 0
      %437 = vmatpush1.bf16.msra.mxu0 0
      %438 = vmatprep.subr.bf16.mxu0 0
      %439 = vmatpush1.bf16.msra.mxu0 0
      %440 = vmatprep.subr.bf16.mxu0 0
      %441 = vmatpush1.bf16.msra.mxu0 0
      %442 = vmatprep.subr.bf16.mxu0 0
      %443 = vmatpush1.bf16.msra.mxu0 0
      %444 = vmatprep.subr.bf16.mxu0 0
      %445 = vmatpush1.bf16.msra.mxu0 0
      %446 = vmatprep.subr.bf16.mxu0 0
      %447 = vmatpush1.bf16.msra.mxu0 0
      %448 = vmatprep.subr.bf16.mxu0 0
      %449 = vmatpush1.bf16.msra.mxu0 0
      %450 = vmatprep.subr.bf16.mxu0 0
      %451 = vmatpush1.bf16.msra.mxu0 0
      %452 = vmatprep.subr.bf16.mxu0 0
      %453 = vmatpush1.bf16.msra.mxu0 0
      %454 = vmatprep.mubr.bf16.mxu0 0
      %455 = vmatmul.mubr.bf16.gmra.mrb[0].mxu0 %v386
      %v456 = vpop.f32.mrb[0].mxu0
      %v457 = vadd.f32 %v372, %v456
      %v458 = vpop.f32.mrb[0].mxu0
      %v459 = vadd.f32 %v376, %v458
      %v460 = vpop.f32.mrb[0].mxu0
      %v461 = vadd.f32 %v372, %v460
      %v462 = vpop.f32.mrb[0].mxu0
      %v463 = vadd.f32 %v376, %v462
      %464 = vmatprep.mubr.bf16.mxu0 0
      %465 = vmatmul.mubr.bf16.gmra.mrb[0].mxu0 %v389
      %v466 = vpop.f32.mrb[0].mxu0
      %v467 = vadd.f32 %v372, %v466
      %v468 = vpop.f32.mrb[0].mxu0
      %v469 = vadd.f32 %v376, %v468
      %v470 = vpop.f32.mrb[0].mxu0
      %v471 = vadd.f32 %v372, %v470
      %v472 = vpop.f32.mrb[0].mxu0
      %v473 = vadd.f32 %v376, %v472
      %474 = vmatprep.mubr.bf16.mxu0 0
      %475 = vmatmul.mubr.bf16.gmra.mrb[0].mxu0 %v392
      %v476 = vpop.f32.mrb[0].mxu0
      %v477 = vadd.f32 %v372, %v476
      %v478 = vpop.f32.mrb[0].mxu0
      %v479 = vadd.f32 %v376, %v478
      %v480 = vpop.f32.mrb[0].mxu0
      %v481 = vadd.f32 %v372, %v480
      %v482 = vpop.f32.mrb[0].mxu0
      %v483 = vadd.f32 %v376, %v482
      %484 = vmatprep.mubr.bf16.mxu0 0
      %485 = vmatmul.mubr.bf16.gmra.mrb[0].mxu0 %v395
      %v486 = vpop.f32.mrb[0].mxu0
      %v487 = vadd.f32 %v372, %v486
      %v488 = vpop.f32.mrb[0].mxu0
      %v489 = vadd.f32 %v376, %v488
      %v490 = vpop.f32.mrb[0].mxu0
      %v491 = vadd.f32 %v372, %v490
      %v492 = vpop.f32.mrb[0].mxu0
      %v493 = vadd.f32 %v376, %v492
      %494 = vmatprep.mubr.bf16.mxu0 0
      %495 = vmatmul.mubr.bf16.gmra.mrb[0].mxu0 %v398
      %v496 = vpop.f32.mrb[0].mxu0
      %v497 = vadd.f32 %v372, %v496
      %v498 = vpop.f32.mrb[0].mxu0
      %v499 = vadd.f32 %v376, %v498
      %v500 = vpop.f32.mrb[0].mxu0
      %v501 = vadd.f32 %v372, %v500
      %v502 = vpop.f32.mrb[0].mxu0
      %v503 = vadd.f32 %v376, %v502
      %504 = vmatprep.mubr.bf16.mxu0 0
      %505 = vmatmul.mubr.bf16.gmra.mrb[0].mxu0 %v401
      %v506 = vpop.f32.mrb[0].mxu0
      %v507 = vadd.f32 %v372, %v506
      %v508 = vpop.f32.mrb[0].mxu0
      %v509 = vadd.f32 %v376, %v508
      %v510 = vpop.f32.mrb[0].mxu0
      %v511 = vadd.f32 %v372, %v510
      %v512 = vpop.f32.mrb[0].mxu0
      %v513 = vadd.f32 %v376, %v512
      %514 = vmatprep.mubr.bf16.mxu0 0
      %515 = vmatmul.mubr.bf16.gmra.mrb[0].mxu0 %v404
      %v516 = vpop.f32.mrb[0].mxu0
      %v517 = vadd.f32 %v372, %v516
      %v518 = vpop.f32.mrb[0].mxu0
      %v519 = vadd.f32 %v376, %v518
      %v520 = vpop.f32.mrb[0].mxu0
      %v521 = vadd.f32 %v372, %v520
      %v522 = vpop.f32.mrb[0].mxu0
      %v523 = vadd.f32 %v376, %v522
      %524 = vmatprep.mubr.bf16.mxu0 0
      %525 = vmatmul.mubr.bf16.gmra.mrb[0].mxu0 %v407
      %v526 = vpop.f32.mrb[0].mxu0
      %v527 = vadd.f32 %v372, %v526
      %v528 = vpop.f32.mrb[0].mxu0
      %v529 = vadd.f32 %v376, %v528
      %v530 = vpop.f32.mrb[0].mxu0
      %v531 = vadd.f32 %v372, %v530
      %v532 = vpop.f32.mrb[0].mxu0
      %v533 = vadd.f32 %v376, %v532
      %534 = vmatprep.mubr.bf16.mxu0 0
      %535 = vmatmul.mubr.bf16.gmra.mrb[0].mxu0 %v410
      %v536 = vpop.f32.mrb[0].mxu0
      %v537 = vadd.f32 %v372, %v536
      %v538 = vpop.f32.mrb[0].mxu0
      %v539 = vadd.f32 %v376, %v538
      %v540 = vpop.f32.mrb[0].mxu0
      %v541 = vadd.f32 %v372, %v540
      %v542 = vpop.f32.mrb[0].mxu0
      %v543 = vadd.f32 %v376, %v542
      %544 = vmatprep.mubr.bf16.mxu0 0
      %545 = vmatmul.mubr.bf16.gmra.mrb[0].mxu0 %v413
      %v546 = vpop.f32.mrb[0].mxu0
      %v547 = vadd.f32 %v372, %v546
      %v548 = vpop.f32.mrb[0].mxu0
      %v549 = vadd.f32 %v376, %v548
      %v550 = vpop.f32.mrb[0].mxu0
      %v551 = vpop.f32.mrb[0].mxu0
      %552 = vdwg.mxu0
      %v553 = vmax.f32 %v457, 0.0
      %v554 = vmax.f32 %v459, 0.0
      %v555 = vmax.f32 %v461, 0.0
      %v556 = vmax.f32 %v463, 0.0
      %v557 = vmax.f32 %v467, 0.0
      %v558 = vmax.f32 %v469, 0.0
      %v559 = vmax.f32 %v471, 0.0
      %v560 = vmax.f32 %v473, 0.0
      %v561 = vmax.f32 %v477, 0.0
      %v562 = vmax.f32 %v479, 0.0
      %v563 = vmax.f32 %v481, 0.0
      %v564 = vmax.f32 %v483, 0.0
      %v565 = vmax.f32 %v487, 0.0
      %v566 = vmax.f32 %v489, 0.0
      %v567 = vmax.f32 %v491, 0.0
      %v568 = vmax.f32 %v493, 0.0
      %v569 = vmax.f32 %v497, 0.0
      %v570 = vmax.f32 %v499, 0.0
      %v571 = vmax.f32 %v501, 0.0
      %v572 = vmax.f32 %v503, 0.0
      %v573 = vmax.f32 %v507, 0.0
      %v574 = vmax.f32 %v509, 0.0
      %v575 = vmax.f32 %v511, 0.0
      %v576 = vmax.f32 %v513, 0.0
      %v577 = vmax.f32 %v517, 0.0
      %v578 = vmax.f32 %v519, 0.0
      %v579 = vmax.f32 %v521, 0.0
      %v580 = vmax.f32 %v523, 0.0
      %v581 = vmax.f32 %v527, 0.0
      %v582 = vmax.f32 %v529, 0.0
      %v583 = vmax.f32 %v531, 0.0
      %v584 = vmax.f32 %v533, 0.0
      %v585 = vmax.f32 %v537, 0.0
      %v586 = vmax.f32 %v539, 0.0
      %v587 = vmax.f32 %v541, 0.0
      %v588 = vmax.f32 %v543, 0.0
      %v589 = vmax.f32 %v547, 0.0
      %v590 = vmax.f32 %v549, 0.0
      %v591 = vpack.c.bf16 %v555, %v553
      %v592 = vpack.c.bf16 %v556, %v554
      %v593 = vpack.c.bf16 %v559, %v557
      %v594 = vpack.c.bf16 %v560, %v558
      %v595 = vpack.c.bf16 %v563, %v561
      %v596 = vpack.c.bf16 %v564, %v562
      %v597 = vpack.c.bf16 %v567, %v565
      %v598 = vpack.c.bf16 %v568, %v566
      %v599 = vpack.c.bf16 %v571, %v569
      %v600 = vpack.c.bf16 %v572, %v570
      %v601 = vpack.c.bf16 %v575, %v573
      %v602 = vpack.c.bf16 %v576, %v574
      %v603 = vpack.c.bf16 %v579, %v577
      %v604 = vpack.c.bf16 %v580, %v578
      %v605 = vpack.c.bf16 %v583, %v581
      %v606 = vpack.c.bf16 %v584, %v582
      %v607 = vpack.c.bf16 %v587, %v585
      %v608 = vpack.c.bf16 %v588, %v586
      %v609 = vpack.c.bf16 %v589, %v589
      %v610 = vpack.c.bf16 %v590, %v590
      %v611 = vld [vmem:[%s3] sm:$0xff]
      %v612 = vld [vmem:[%s3 + $0x8] sm:$0xff]
      %v613 = vld [vmem:[%s3 + $0x10] sm:$0xff]
      %v614 = vld [vmem:[%s3 + $0x18] sm:$0xff]
      %v615 = vld [vmem:[%s3 + $0x20] sm:$0xff]
      %v616 = vld [vmem:[%s3 + $0x28] sm:$0xff]
      %v617 = vld [vmem:[%s3 + $0x30] sm:$0xff]
      %v618 = vld [vmem:[%s3 + $0x38] sm:$0xff]
      %v619 = vld [vmem:[%s3 + $0x40] sm:$0xff]
      %v620 = vld [vmem:[%s3 + $0x48] sm:$0xff]
      %v621 = vld [vmem:[%s3 + $0x50] sm:$0xff]
      %v622 = vld [vmem:[%s3 + $0x58] sm:$0xff]
      %v623 = vld [vmem:[%s3 + $0x60] sm:$0xff]
      %v624 = vld [vmem:[%s3 + $0x68] sm:$0xff]
      %v625 = vld [vmem:[%s3 + $0x70] sm:$0xff]
      %v626 = vld [vmem:[%s3 + $0x78] sm:$0xff]
      %v627 = vld [vmem:[%s3 + $0x80] sm:$0xff]
      %v628 = vld [vmem:[%s3 + $0x88] sm:$0xff]
      %v629 = vld [vmem:[%s3 + $0x90] sm:$0xff]
      %v630 = vld [vmem:[%s3 + $0x98] sm:$0xff]
      %v631 = vld [vmem:[%s3 + $0xa0] sm:$0xff]
      %v632 = vld [vmem:[%s3 + $0xa8] sm:$0xff]
      %v633 = vld [vmem:[%s3 + $0xb0] sm:$0xff]
      %v634 = vld [vmem:[%s3 + $0xb8] sm:$0xff]
      %v635 = vld [vmem:[%s3 + $0xc0] sm:$0xff]
      %v636 = vld [vmem:[%s3 + $0xc8] sm:$0xff]
      %v637 = vld [vmem:[%s3 + $0xd0] sm:$0xff]
      %v638 = vld [vmem:[%s3 + $0xd8] sm:$0xff]
      %v639 = vld [vmem:[%s3 + $0xe0] sm:$0xff]
      %v640 = vld [vmem:[%s3 + $0xe8] sm:$0xff]
      %v641 = vld [vmem:[%s3 + $0xf0] sm:$0xff]
      %v642 = vld [vmem:[%s3 + $0xf8] sm:$0xff]
      %v643 = vld [vmem:[%s4] sm:$0x3]
      %v645 = vlaneseq
      %v646 = vshrl.u32 %v645, 7
      %v647 = vsub.s32 0, %v646
      %v648 = vrot.slane %v643, %v647
      %v649 = vlaneseq
      %v650 = vshrl.u32 %v649, 7
      %v651 = vsub.s32 1, %v650
      %v652 = vrot.slane %v643, %v651
      %v687 = vunpack.c.l.b16 %v611
      %v688 = vunpack.c.h.b16 %v611
      %v689 = vunpack.c.l.b16 %v612
      %v690 = vunpack.c.h.b16 %v612
      %v691 = vunpack.c.l.b16 %v613
      %v692 = vunpack.c.h.b16 %v613
      %v693 = vunpack.c.l.b16 %v614
      %v694 = vunpack.c.h.b16 %v614
      %v695 = vunpack.c.l.b16 %v615
      %v696 = vunpack.c.h.b16 %v615
      %v697 = vunpack.c.l.b16 %v616
      %v698 = vunpack.c.h.b16 %v616
      %v699 = vunpack.c.l.b16 %v617
      %v700 = vunpack.c.h.b16 %v617
      %v701 = vunpack.c.l.b16 %v618
      %v702 = vunpack.c.h.b16 %v618
      %v703 = vunpack.c.l.b16 %v619
      %v704 = vunpack.c.h.b16 %v619
      %v705 = vunpack.c.l.b16 %v620
      %v706 = vunpack.c.h.b16 %v620
      %v707 = vunpack.c.l.b16 %v621
      %v708 = vunpack.c.h.b16 %v621
      %v709 = vunpack.c.l.b16 %v622
      %v710 = vunpack.c.h.b16 %v622
      %v711 = vunpack.c.l.b16 %v623
      %v712 = vunpack.c.h.b16 %v623
      %v713 = vunpack.c.l.b16 %v624
      %v714 = vunpack.c.h.b16 %v624
      %v715 = vunpack.c.l.b16 %v625
      %v716 = vunpack.c.h.b16 %v625
      %v717 = vunpack.c.l.b16 %v626
      %v718 = vunpack.c.h.b16 %v626
      %v719 = vunpack.c.l.b16 %v627
      %v720 = vunpack.c.h.b16 %v627
      %v721 = vunpack.c.l.b16 %v628
      %v722 = vunpack.c.h.b16 %v628
      %v723 = vunpack.c.l.b16 %v629
      %v724 = vunpack.c.h.b16 %v629
      %v725 = vunpack.c.l.b16 %v630
      %v726 = vunpack.c.h.b16 %v630
      %v727 = vunpack.c.l.b16 %v631
      %v728 = vunpack.c.h.b16 %v631
      %v729 = vunpack.c.l.b16 %v632
      %v730 = vunpack.c.h.b16 %v632
      %v731 = vunpack.c.l.b16 %v633
      %v732 = vunpack.c.h.b16 %v633
      %v733 = vunpack.c.l.b16 %v634
      %v734 = vunpack.c.h.b16 %v634
      %v735 = vunpack.c.l.b16 %v635
      %v736 = vunpack.c.h.b16 %v635
      %v737 = vunpack.c.l.b16 %v636
      %v738 = vunpack.c.h.b16 %v636
      %v739 = vunpack.c.l.b16 %v637
      %v740 = vunpack.c.h.b16 %v637
      %v741 = vunpack.c.l.b16 %v638
      %v742 = vunpack.c.h.b16 %v638
      %v743 = vunpack.c.l.b16 %v639
      %v744 = vunpack.c.h.b16 %v639
      %v745 = vunpack.c.l.b16 %v640
      %v746 = vunpack.c.h.b16 %v640
      %v747 = vunpack.c.l.b16 %v641
      %v748 = vunpack.c.h.b16 %v641
      %v749 = vunpack.c.l.b16 %v642
      %v750 = vunpack.c.h.b16 %v642
      %v751 = vpack.c.b16 %v689, %v687
      %v752 = vpack.c.b16 %v690, %v688
      %v753 = vpack.c.b16 %v693, %v691
      %v754 = vpack.c.b16 %v694, %v692
      %v755 = vpack.c.b16 %v697, %v695
      %v756 = vpack.c.b16 %v698, %v696
      %v757 = vpack.c.b16 %v701, %v699
      %v758 = vpack.c.b16 %v702, %v700
      %v759 = vpack.c.b16 %v705, %v703
      %v760 = vpack.c.b16 %v706, %v704
      %v761 = vpack.c.b16 %v709, %v707
      %v762 = vpack.c.b16 %v710, %v708
      %v763 = vpack.c.b16 %v713, %v711
      %v764 = vpack.c.b16 %v714, %v712
      %v765 = vpack.c.b16 %v717, %v715
      %v766 = vpack.c.b16 %v718, %v716
      %v767 = vpack.c.b16 %v721, %v719
      %v768 = vpack.c.b16 %v722, %v720
      %v769 = vpack.c.b16 %v725, %v723
      %v770 = vpack.c.b16 %v726, %v724
      %v771 = vpack.c.b16 %v729, %v727
      %v772 = vpack.c.b16 %v730, %v728
      %v773 = vpack.c.b16 %v733, %v731
      %v774 = vpack.c.b16 %v734, %v732
      %v775 = vpack.c.b16 %v737, %v735
      %v776 = vpack.c.b16 %v738, %v736
      %v777 = vpack.c.b16 %v741, %v739
      %v778 = vpack.c.b16 %v742, %v740
      %v779 = vpack.c.b16 %v745, %v743
      %v780 = vpack.c.b16 %v746, %v744
      %v781 = vpack.c.b16 %v749, %v747
      %v782 = vpack.c.b16 %v750, %v748
      %815 = vmatprep.subr.bf16.mxu0 %v752
      %816 = vmatpush1.bf16.msra.mxu0 %v751
      %817 = vmatprep.subr.bf16.mxu0 %v754
      %818 = vmatpush1.bf16.msra.mxu0 %v753
      %819 = vmatprep.subr.bf16.mxu0 %v756
      %820 = vmatpush1.bf16.msra.mxu0 %v755
      %821 = vmatprep.subr.bf16.mxu0 %v758
      %822 = vmatpush1.bf16.msra.mxu0 %v757
      %823 = vmatprep.subr.bf16.mxu0 %v760
      %824 = vmatpush1.bf16.msra.mxu0 %v759
      %825 = vmatprep.subr.bf16.mxu0 %v762
      %826 = vmatpush1.bf16.msra.mxu0 %v761
      %827 = vmatprep.subr.bf16.mxu0 %v764
      %828 = vmatpush1.bf16.msra.mxu0 %v763
      %829 = vmatprep.subr.bf16.mxu0 %v766
      %830 = vmatpush1.bf16.msra.mxu0 %v765
      %831 = vmatprep.subr.bf16.mxu0 %v768
      %832 = vmatpush1.bf16.msra.mxu0 %v767
      %833 = vmatprep.subr.bf16.mxu0 %v770
      %834 = vmatpush1.bf16.msra.mxu0 %v769
      %835 = vmatprep.subr.bf16.mxu0 %v772
      %836 = vmatpush1.bf16.msra.mxu0 %v771
      %837 = vmatprep.subr.bf16.mxu0 %v774
      %838 = vmatpush1.bf16.msra.mxu0 %v773
      %839 = vmatprep.subr.bf16.mxu0 %v776
      %840 = vmatpush1.bf16.msra.mxu0 %v775
      %841 = vmatprep.subr.bf16.mxu0 %v778
      %842 = vmatpush1.bf16.msra.mxu0 %v777
      %843 = vmatprep.subr.bf16.mxu0 %v780
      %844 = vmatpush1.bf16.msra.mxu0 %v779
      %845 = vmatprep.subr.bf16.mxu0 %v782
      %846 = vmatpush1.bf16.msra.mxu0 %v781
      %847 = vmatprep.mubr.bf16.mxu0 %v592
      %848 = vmatmul.mubr.bf16.gmra.mrb[0].mxu0 %v591
      %v849 = vpop.f32.mrb[0].mxu0
      %v850 = vadd.f32 %v648, %v849
      %v851 = vpop.f32.mrb[0].mxu0
      %v852 = vadd.f32 %v652, %v851
      %v853 = vpop.f32.mrb[0].mxu0
      %v854 = vadd.f32 %v648, %v853
      %v855 = vpop.f32.mrb[0].mxu0
      %v856 = vadd.f32 %v652, %v855
      %857 = vmatprep.mubr.bf16.mxu0 %v594
      %858 = vmatmul.mubr.bf16.gmra.mrb[0].mxu0 %v593
      %v859 = vpop.f32.mrb[0].mxu0
      %v860 = vadd.f32 %v648, %v859
      %v861 = vpop.f32.mrb[0].mxu0
      %v862 = vadd.f32 %v652, %v861
      %v863 = vpop.f32.mrb[0].mxu0
      %v864 = vadd.f32 %v648, %v863
      %v865 = vpop.f32.mrb[0].mxu0
      %v866 = vadd.f32 %v652, %v865
      %867 = vmatprep.mubr.bf16.mxu0 %v596
      %868 = vmatmul.mubr.bf16.gmra.mrb[0].mxu0 %v595
      %v869 = vpop.f32.mrb[0].mxu0
      %v870 = vadd.f32 %v648, %v869
      %v871 = vpop.f32.mrb[0].mxu0
      %v872 = vadd.f32 %v652, %v871
      %v873 = vpop.f32.mrb[0].mxu0
      %v874 = vadd.f32 %v648, %v873
      %v875 = vpop.f32.mrb[0].mxu0
      %v876 = vadd.f32 %v652, %v875
      %877 = vmatprep.mubr.bf16.mxu0 %v598
      %878 = vmatmul.mubr.bf16.gmra.mrb[0].mxu0 %v597
      %v879 = vpop.f32.mrb[0].mxu0
      %v880 = vadd.f32 %v648, %v879
      %v881 = vpop.f32.mrb[0].mxu0
      %v882 = vadd.f32 %v652, %v881
      %v883 = vpop.f32.mrb[0].mxu0
      %v884 = vadd.f32 %v648, %v883
      %v885 = vpop.f32.mrb[0].mxu0
      %v886 = vadd.f32 %v652, %v885
      %887 = vmatprep.mubr.bf16.mxu0 %v600
      %888 = vmatmul.mubr.bf16.gmra.mrb[0].mxu0 %v599
      %v889 = vpop.f32.mrb[0].mxu0
      %v890 = vadd.f32 %v648, %v889
      %v891 = vpop.f32.mrb[0].mxu0
      %v892 = vadd.f32 %v652, %v891
      %v893 = vpop.f32.mrb[0].mxu0
      %v894 = vadd.f32 %v648, %v893
      %v895 = vpop.f32.mrb[0].mxu0
      %v896 = vadd.f32 %v652, %v895
      %897 = vmatprep.mubr.bf16.mxu0 %v602
      %898 = vmatmul.mubr.bf16.gmra.mrb[0].mxu0 %v601
      %v899 = vpop.f32.mrb[0].mxu0
      %v900 = vadd.f32 %v648, %v899
      %v901 = vpop.f32.mrb[0].mxu0
      %v902 = vadd.f32 %v652, %v901
      %v903 = vpop.f32.mrb[0].mxu0
      %v904 = vadd.f32 %v648, %v903
      %v905 = vpop.f32.mrb[0].mxu0
      %v906 = vadd.f32 %v652, %v905
      %907 = vmatprep.mubr.bf16.mxu0 %v604
      %908 = vmatmul.mubr.bf16.gmra.mrb[0].mxu0 %v603
      %v909 = vpop.f32.mrb[0].mxu0
      %v910 = vadd.f32 %v648, %v909
      %v911 = vpop.f32.mrb[0].mxu0
      %v912 = vadd.f32 %v652, %v911
      %v913 = vpop.f32.mrb[0].mxu0
      %v914 = vadd.f32 %v648, %v913
      %v915 = vpop.f32.mrb[0].mxu0
      %v916 = vadd.f32 %v652, %v915
      %917 = vmatprep.mubr.bf16.mxu0 %v606
      %918 = vmatmul.mubr.bf16.gmra.mrb[0].mxu0 %v605
      %v919 = vpop.f32.mrb[0].mxu0
      %v920 = vadd.f32 %v648, %v919
      %v921 = vpop.f32.mrb[0].mxu0
      %v922 = vadd.f32 %v652, %v921
      %v923 = vpop.f32.mrb[0].mxu0
      %v924 = vadd.f32 %v648, %v923
      %v925 = vpop.f32.mrb[0].mxu0
      %v926 = vadd.f32 %v652, %v925
      %927 = vmatprep.mubr.bf16.mxu0 %v608
      %928 = vmatmul.mubr.bf16.gmra.mrb[0].mxu0 %v607
      %v929 = vpop.f32.mrb[0].mxu0
      %v930 = vadd.f32 %v648, %v929
      %v931 = vpop.f32.mrb[0].mxu0
      %v932 = vadd.f32 %v652, %v931
      %v933 = vpop.f32.mrb[0].mxu0
      %v934 = vadd.f32 %v648, %v933
      %v935 = vpop.f32.mrb[0].mxu0
      %v936 = vadd.f32 %v652, %v935
      %937 = vmatprep.mubr.bf16.mxu0 %v610
      %938 = vmatmul.mubr.bf16.gmra.mrb[0].mxu0 %v609
      %v939 = vpop.f32.mrb[0].mxu0
      %v940 = vadd.f32 %v648, %v939
      %v941 = vpop.f32.mrb[0].mxu0
      %v942 = vadd.f32 %v652, %v941
      %v943 = vpop.f32.mrb[0].mxu0
      %v944 = vpop.f32.mrb[0].mxu0
      %945 = vdwg.mxu0
      %v946 = vmax.f32 %v850, 0.0
      %v947 = vmax.f32 %v852, 0.0
      %v948 = vmax.f32 %v854, 0.0
      %v949 = vmax.f32 %v856, 0.0
      %v950 = vmax.f32 %v860, 0.0
      %v951 = vmax.f32 %v862, 0.0
      %v952 = vmax.f32 %v864, 0.0
      %v953 = vmax.f32 %v866, 0.0
      %v954 = vmax.f32 %v870, 0.0
      %v955 = vmax.f32 %v872, 0.0
      %v956 = vmax.f32 %v874, 0.0
      %v957 = vmax.f32 %v876, 0.0
      %v958 = vmax.f32 %v880, 0.0
      %v959 = vmax.f32 %v882, 0.0
      %v960 = vmax.f32 %v884, 0.0
      %v961 = vmax.f32 %v886, 0.0
      %v962 = vmax.f32 %v890, 0.0
      %v963 = vmax.f32 %v892, 0.0
      %v964 = vmax.f32 %v894, 0.0
      %v965 = vmax.f32 %v896, 0.0
      %v966 = vmax.f32 %v900, 0.0
      %v967 = vmax.f32 %v902, 0.0
      %v968 = vmax.f32 %v904, 0.0
      %v969 = vmax.f32 %v906, 0.0
      %v970 = vmax.f32 %v910, 0.0
      %v971 = vmax.f32 %v912, 0.0
      %v972 = vmax.f32 %v914, 0.0
      %v973 = vmax.f32 %v916, 0.0
      %v974 = vmax.f32 %v920, 0.0
      %v975 = vmax.f32 %v922, 0.0
      %v976 = vmax.f32 %v924, 0.0
      %v977 = vmax.f32 %v926, 0.0
      %v978 = vmax.f32 %v930, 0.0
      %v979 = vmax.f32 %v932, 0.0
      %v980 = vmax.f32 %v934, 0.0
      %v981 = vmax.f32 %v936, 0.0
      %v982 = vmax.f32 %v940, 0.0
      %v983 = vmax.f32 %v942, 0.0
      %v984 = vpack.c.bf16 %v948, %v946
      %v985 = vpack.c.bf16 %v949, %v947
      %v986 = vpack.c.bf16 %v952, %v950
      %v987 = vpack.c.bf16 %v953, %v951
      %v988 = vpack.c.bf16 %v956, %v954
      %v989 = vpack.c.bf16 %v957, %v955
      %v990 = vpack.c.bf16 %v960, %v958
      %v991 = vpack.c.bf16 %v961, %v959
      %v992 = vpack.c.bf16 %v964, %v962
      %v993 = vpack.c.bf16 %v965, %v963
      %v994 = vpack.c.bf16 %v968, %v966
      %v995 = vpack.c.bf16 %v969, %v967
      %v996 = vpack.c.bf16 %v972, %v970
      %v997 = vpack.c.bf16 %v973, %v971
      %v998 = vpack.c.bf16 %v976, %v974
      %v999 = vpack.c.bf16 %v977, %v975
      %v1000 = vpack.c.bf16 %v980, %v978
      %v1001 = vpack.c.bf16 %v981, %v979
      %v1002 = vpack.c.bf16 %v982, %v982
      %v1003 = vpack.c.bf16 %v983, %v983
      %v1004 = vld [vmem:[%s5] sm:$0xf]
      %v1005 = vld [vmem:[%s5 + $0x4] sm:$0xf]
      %v1006 = vld [vmem:[%s5 + $0x8] sm:$0xf]
      %v1007 = vld [vmem:[%s5 + $0xc] sm:$0xf]
      %v1008 = vld [vmem:[%s5 + $0x10] sm:$0xf]
      %v1009 = vld [vmem:[%s5 + $0x14] sm:$0xf]
      %v1010 = vld [vmem:[%s5 + $0x18] sm:$0xf]
      %v1011 = vld [vmem:[%s5 + $0x1c] sm:$0xf]
      %v1012 = vld [vmem:[%s5 + $0x20] sm:$0xf]
      %v1013 = vld [vmem:[%s5 + $0x24] sm:$0xf]
      %v1014 = vld [vmem:[%s5 + $0x28] sm:$0xf]
      %v1015 = vld [vmem:[%s5 + $0x2c] sm:$0xf]
      %v1016 = vld [vmem:[%s5 + $0x30] sm:$0xf]
      %v1017 = vld [vmem:[%s5 + $0x34] sm:$0xf]
      %v1018 = vld [vmem:[%s5 + $0x38] sm:$0xf]
      %v1019 = vld [vmem:[%s5 + $0x3c] sm:$0xf]
      %v1020 = vld [vmem:[%s5 + $0x40] sm:$0xf]
      %v1021 = vld [vmem:[%s5 + $0x44] sm:$0xf]
      %v1022 = vld [vmem:[%s5 + $0x48] sm:$0xf]
      %v1023 = vld [vmem:[%s5 + $0x4c] sm:$0xf]
      %v1024 = vld [vmem:[%s5 + $0x50] sm:$0xf]
      %v1025 = vld [vmem:[%s5 + $0x54] sm:$0xf]
      %v1026 = vld [vmem:[%s5 + $0x58] sm:$0xf]
      %v1027 = vld [vmem:[%s5 + $0x5c] sm:$0xf]
      %v1028 = vld [vmem:[%s5 + $0x60] sm:$0xf]
      %v1029 = vld [vmem:[%s5 + $0x64] sm:$0xf]
      %v1030 = vld [vmem:[%s5 + $0x68] sm:$0xf]
      %v1031 = vld [vmem:[%s5 + $0x6c] sm:$0xf]
      %v1032 = vld [vmem:[%s5 + $0x70] sm:$0xf]
      %v1033 = vld [vmem:[%s5 + $0x74] sm:$0xf]
      %v1034 = vld [vmem:[%s5 + $0x78] sm:$0xf]
      %v1035 = vld [vmem:[%s5 + $0x7c] sm:$0xf]
      %v1036 = vld [vmem:[%s6] sm:$0x1]
      %v1038 = vlaneseq
      %v1039 = vshrl.u32 %v1038, 7
      %v1040 = vsub.s32 0, %v1039
      %v1041 = vrot.slane %v1036, %v1040
      %v1075 = vunpack.c.l.b16 %v1004
      %v1076 = vunpack.c.l.b16 %v1005
      %v1077 = vunpack.c.l.b16 %v1006
      %v1078 = vunpack.c.l.b16 %v1007
      %v1079 = vunpack.c.l.b16 %v1008
      %v1080 = vunpack.c.l.b16 %v1009
      %v1081 = vunpack.c.l.b16 %v1010
      %v1082 = vunpack.c.l.b16 %v1011
      %v1083 = vunpack.c.l.b16 %v1012
      %v1084 = vunpack.c.l.b16 %v1013
      %v1085 = vunpack.c.l.b16 %v1014
      %v1086 = vunpack.c.l.b16 %v1015
      %v1087 = vunpack.c.l.b16 %v1016
      %v1088 = vunpack.c.l.b16 %v1017
      %v1089 = vunpack.c.l.b16 %v1018
      %v1090 = vunpack.c.l.b16 %v1019
      %v1091 = vunpack.c.l.b16 %v1020
      %v1092 = vunpack.c.l.b16 %v1021
      %v1093 = vunpack.c.l.b16 %v1022
      %v1094 = vunpack.c.l.b16 %v1023
      %v1095 = vunpack.c.l.b16 %v1024
      %v1096 = vunpack.c.l.b16 %v1025
      %v1097 = vunpack.c.l.b16 %v1026
      %v1098 = vunpack.c.l.b16 %v1027
      %v1099 = vunpack.c.l.b16 %v1028
      %v1100 = vunpack.c.l.b16 %v1029
      %v1101 = vunpack.c.l.b16 %v1030
      %v1102 = vunpack.c.l.b16 %v1031
      %v1103 = vunpack.c.l.b16 %v1032
      %v1104 = vunpack.c.l.b16 %v1033
      %v1105 = vunpack.c.l.b16 %v1034
      %v1106 = vunpack.c.l.b16 %v1035
      %v1107 = vpack.c.b16 %v1076, %v1075
      %v1108 = vpack.c.b16 %v1078, %v1077
      %v1109 = vpack.c.b16 %v1080, %v1079
      %v1110 = vpack.c.b16 %v1082, %v1081
      %v1111 = vpack.c.b16 %v1084, %v1083
      %v1112 = vpack.c.b16 %v1086, %v1085
      %v1113 = vpack.c.b16 %v1088, %v1087
      %v1114 = vpack.c.b16 %v1090, %v1089
      %v1115 = vpack.c.b16 %v1092, %v1091
      %v1116 = vpack.c.b16 %v1094, %v1093
      %v1117 = vpack.c.b16 %v1096, %v1095
      %v1118 = vpack.c.b16 %v1098, %v1097
      %v1119 = vpack.c.b16 %v1100, %v1099
      %v1120 = vpack.c.b16 %v1102, %v1101
      %v1121 = vpack.c.b16 %v1104, %v1103
      %v1122 = vpack.c.b16 %v1106, %v1105
      %1139 = vmatprep.subr.bf16.mxu0 0
      %1140 = vmatpush1.bf16.msra.mxu0 %v1107
      %1141 = vmatprep.subr.bf16.mxu0 0
      %1142 = vmatpush1.bf16.msra.mxu0 %v1108
      %1143 = vmatprep.subr.bf16.mxu0 0
      %1144 = vmatpush1.bf16.msra.mxu0 %v1109
      %1145 = vmatprep.subr.bf16.mxu0 0
      %1146 = vmatpush1.bf16.msra.mxu0 %v1110
      %1147 = vmatprep.subr.bf16.mxu0 0
      %1148 = vmatpush1.bf16.msra.mxu0 %v1111
      %1149 = vmatprep.subr.bf16.mxu0 0
      %1150 = vmatpush1.bf16.msra.mxu0 %v1112
      %1151 = vmatprep.subr.bf16.mxu0 0
      %1152 = vmatpush1.bf16.msra.mxu0 %v1113
      %1153 = vmatprep.subr.bf16.mxu0 0
      %1154 = vmatpush1.bf16.msra.mxu0 %v1114
      %1155 = vmatprep.subr.bf16.mxu0 0
      %1156 = vmatpush1.bf16.msra.mxu0 %v1115
      %1157 = vmatprep.subr.bf16.mxu0 0
      %1158 = vmatpush1.bf16.msra.mxu0 %v1116
      %1159 = vmatprep.subr.bf16.mxu0 0
      %1160 = vmatpush1.bf16.msra.mxu0 %v1117
      %1161 = vmatprep.subr.bf16.mxu0 0
      %1162 = vmatpush1.bf16.msra.mxu0 %v1118
      %1163 = vmatprep.subr.bf16.mxu0 0
      %1164 = vmatpush1.bf16.msra.mxu0 %v1119
      %1165 = vmatprep.subr.bf16.mxu0 0
      %1166 = vmatpush1.bf16.msra.mxu0 %v1120
      %1167 = vmatprep.subr.bf16.mxu0 0
      %1168 = vmatpush1.bf16.msra.mxu0 %v1121
      %1169 = vmatprep.subr.bf16.mxu0 0
      %1170 = vmatpush1.bf16.msra.mxu0 %v1122
      %1171 = vmatprep.mubr.bf16.mxu0 %v985
      %1172 = vmatmul.mubr.bf16.gmra.mrb[0].mxu0 %v984
      %v1173 = vpop.f32.mrb[0].mxu0
      %v1174 = vadd.f32 %v1041, %v1173
      %v1175 = vpop.f32.mrb[0].mxu0
      %v1176 = vpop.f32.mrb[0].mxu0
      %v1177 = vadd.f32 %v1041, %v1176
      %v1178 = vpop.f32.mrb[0].mxu0
      %1179 = vmatprep.mubr.bf16.mxu0 %v987
      %1180 = vmatmul.mubr.bf16.gmra.mrb[0].mxu0 %v986
      %v1181 = vpop.f32.mrb[0].mxu0
      %v1182 = vadd.f32 %v1041, %v1181
      %v1183 = vpop.f32.mrb[0].mxu0
      %v1184 = vpop.f32.mrb[0].mxu0
      %v1185 = vadd.f32 %v1041, %v1184
      %v1186 = vpop.f32.mrb[0].mxu0
      %1187 = vmatprep.mubr.bf16.mxu0 %v989
      %1188 = vmatmul.mubr.bf16.gmra.mrb[0].mxu0 %v988
      %v1189 = vpop.f32.mrb[0].mxu0
      %v1190 = vadd.f32 %v1041, %v1189
      %v1191 = vpop.f32.mrb[0].mxu0
      %v1192 = vpop.f32.mrb[0].mxu0
      %v1193 = vadd.f32 %v1041, %v1192
      %v1194 = vpop.f32.mrb[0].mxu0
      %1195 = vmatprep.mubr.bf16.mxu0 %v991
      %1196 = vmatmul.mubr.bf16.gmra.mrb[0].mxu0 %v990
      %v1197 = vpop.f32.mrb[0].mxu0
      %v1198 = vadd.f32 %v1041, %v1197
      %v1199 = vpop.f32.mrb[0].mxu0
      %v1200 = vpop.f32.mrb[0].mxu0
      %v1201 = vadd.f32 %v1041, %v1200
      %v1202 = vpop.f32.mrb[0].mxu0
      %1203 = vmatprep.mubr.bf16.mxu0 %v993
      %1204 = vmatmul.mubr.bf16.gmra.mrb[0].mxu0 %v992
      %v1205 = vpop.f32.mrb[0].mxu0
      %v1206 = vadd.f32 %v1041, %v1205
      %v1207 = vpop.f32.mrb[0].mxu0
      %v1208 = vpop.f32.mrb[0].mxu0
      %v1209 = vadd.f32 %v1041, %v1208
      %v1210 = vpop.f32.mrb[0].mxu0
      %1211 = vmatprep.mubr.bf16.mxu0 %v995
      %1212 = vmatmul.mubr.bf16.gmra.mrb[0].mxu0 %v994
      %v1213 = vpop.f32.mrb[0].mxu0
      %v1214 = vadd.f32 %v1041, %v1213
      %v1215 = vpop.f32.mrb[0].mxu0
      %v1216 = vpop.f32.mrb[0].mxu0
      %v1217 = vadd.f32 %v1041, %v1216
      %v1218 = vpop.f32.mrb[0].mxu0
      %1219 = vmatprep.mubr.bf16.mxu0 %v997
      %1220 = vmatmul.mubr.bf16.gmra.mrb[0].mxu0 %v996
      %v1221 = vpop.f32.mrb[0].mxu0
      %v1222 = vadd.f32 %v1041, %v1221
      %v1223 = vpop.f32.mrb[0].mxu0
      %v1224 = vpop.f32.mrb[0].mxu0
      %v1225 = vadd.f32 %v1041, %v1224
      %v1226 = vpop.f32.mrb[0].mxu0
      %1227 = vmatprep.mubr.bf16.mxu0 %v999
      %1228 = vmatmul.mubr.bf16.gmra.mrb[0].mxu0 %v998
      %v1229 = vpop.f32.mrb[0].mxu0
      %v1230 = vadd.f32 %v1041, %v1229
      %v1231 = vpop.f32.mrb[0].mxu0
      %v1232 = vpop.f32.mrb[0].mxu0
      %v1233 = vadd.f32 %v1041, %v1232
      %v1234 = vpop.f32.mrb[0].mxu0
      %1235 = vmatprep.mubr.bf16.mxu0 %v1001
      %1236 = vmatmul.mubr.bf16.gmra.mrb[0].mxu0 %v1000
      %v1237 = vpop.f32.mrb[0].mxu0
      %v1238 = vadd.f32 %v1041, %v1237
      %v1239 = vpop.f32.mrb[0].mxu0
      %v1240 = vpop.f32.mrb[0].mxu0
      %v1241 = vadd.f32 %v1041, %v1240
      %v1242 = vpop.f32.mrb[0].mxu0
      %1243 = vmatprep.mubr.bf16.mxu0 %v1003
      %1244 = vmatmul.mubr.bf16.gmra.mrb[0].mxu0 %v1002
      %v1245 = vpop.f32.mrb[0].mxu0
      %v1246 = vadd.f32 %v1041, %v1245
      %v1247 = vpop.f32.mrb[0].mxu0
      %v1248 = vpop.f32.mrb[0].mxu0
      %v1249 = vpop.f32.mrb[0].mxu0
      %1250 = vdwg.mxu0
      %v1251 = vmax.f32 %v1174, 0.0
      %v1252 = vmax.f32 %v1177, 0.0
      %v1253 = vmax.f32 %v1182, 0.0
      %v1254 = vmax.f32 %v1185, 0.0
      %v1255 = vmax.f32 %v1190, 0.0
      %v1256 = vmax.f32 %v1193, 0.0
      %v1257 = vmax.f32 %v1198, 0.0
      %v1258 = vmax.f32 %v1201, 0.0
      %v1259 = vmax.f32 %v1206, 0.0
      %v1260 = vmax.f32 %v1209, 0.0
      %v1261 = vmax.f32 %v1214, 0.0
      %v1262 = vmax.f32 %v1217, 0.0
      %v1263 = vmax.f32 %v1222, 0.0
      %v1264 = vmax.f32 %v1225, 0.0
      %v1265 = vmax.f32 %v1230, 0.0
      %v1266 = vmax.f32 %v1233, 0.0
      %v1267 = vmax.f32 %v1238, 0.0
      %v1268 = vmax.f32 %v1241, 0.0
      %v1269 = vmax.f32 %v1246, 0.0
      %v1270 = vpack.c.bf16 %v1252, %v1251
      %v1271 = vpack.c.bf16 %v1254, %v1253
      %v1272 = vpack.c.bf16 %v1256, %v1255
      %v1273 = vpack.c.bf16 %v1258, %v1257
      %v1274 = vpack.c.bf16 %v1260, %v1259
      %v1275 = vpack.c.bf16 %v1262, %v1261
      %v1276 = vpack.c.bf16 %v1264, %v1263
      %v1277 = vpack.c.bf16 %v1266, %v1265
      %v1278 = vpack.c.bf16 %v1268, %v1267
      %v1279 = vpack.c.bf16 %v1269, %v1269
      %v1280 = vld [vmem:[%s7] sm:$0xf]
      %v1281 = vld [vmem:[%s7 + $0x4] sm:$0xf]
      %v1282 = vld [vmem:[%s7 + $0x8] sm:$0xf]
      %v1283 = vld [vmem:[%s7 + $0xc] sm:$0xf]
      %v1284 = vld [vmem:[%s7 + $0x10] sm:$0xf]
      %v1285 = vld [vmem:[%s7 + $0x14] sm:$0xf]
      %v1286 = vld [vmem:[%s7 + $0x18] sm:$0xf]
      %v1287 = vld [vmem:[%s7 + $0x1c] sm:$0xf]
      %v1288 = vld [vmem:[%s7 + $0x20] sm:$0xf]
      %v1289 = vld [vmem:[%s7 + $0x24] sm:$0xf]
      %v1290 = vld [vmem:[%s7 + $0x28] sm:$0xf]
      %v1291 = vld [vmem:[%s7 + $0x2c] sm:$0xf]
      %v1292 = vld [vmem:[%s7 + $0x30] sm:$0xf]
      %v1293 = vld [vmem:[%s7 + $0x34] sm:$0xf]
      %v1294 = vld [vmem:[%s7 + $0x38] sm:$0xf]
      %v1295 = vld [vmem:[%s7 + $0x3c] sm:$0xf]
      %v1296 = vld [vmem:[%s8] sm:$0x1]
      %v1298 = vlaneseq
      %v1299 = vshrl.u32 %v1298, 7
      %v1300 = vsub.s32 0, %v1299
      %v1301 = vrot.slane %v1296, %v1300
      %v1319 = vunpack.c.l.b16 %v1280
      %v1320 = vunpack.c.l.b16 %v1281
      %v1321 = vunpack.c.l.b16 %v1282
      %v1322 = vunpack.c.l.b16 %v1283
      %v1323 = vunpack.c.l.b16 %v1284
      %v1324 = vunpack.c.l.b16 %v1285
      %v1325 = vunpack.c.l.b16 %v1286
      %v1326 = vunpack.c.l.b16 %v1287
      %v1327 = vunpack.c.l.b16 %v1288
      %v1328 = vunpack.c.l.b16 %v1289
      %v1329 = vunpack.c.l.b16 %v1290
      %v1330 = vunpack.c.l.b16 %v1291
      %v1331 = vunpack.c.l.b16 %v1292
      %v1332 = vunpack.c.l.b16 %v1293
      %v1333 = vunpack.c.l.b16 %v1294
      %v1334 = vunpack.c.l.b16 %v1295
      %v1335 = vpack.c.b16 %v1320, %v1319
      %v1336 = vpack.c.b16 %v1322, %v1321
      %v1337 = vpack.c.b16 %v1324, %v1323
      %v1338 = vpack.c.b16 %v1326, %v1325
      %v1339 = vpack.c.b16 %v1328, %v1327
      %v1340 = vpack.c.b16 %v1330, %v1329
      %v1341 = vpack.c.b16 %v1332, %v1331
      %v1342 = vpack.c.b16 %v1334, %v1333
      %1351 = vmatprep.subr.bf16.mxu0 0
      %1352 = vmatpush1.bf16.msra.mxu0 %v1335
      %1353 = vmatprep.subr.bf16.mxu0 0
      %1354 = vmatpush1.bf16.msra.mxu0 %v1336
      %1355 = vmatprep.subr.bf16.mxu0 0
      %1356 = vmatpush1.bf16.msra.mxu0 %v1337
      %1357 = vmatprep.subr.bf16.mxu0 0
      %1358 = vmatpush1.bf16.msra.mxu0 %v1338
      %1359 = vmatprep.subr.bf16.mxu0 0
      %1360 = vmatpush1.bf16.msra.mxu0 %v1339
      %1361 = vmatprep.subr.bf16.mxu0 0
      %1362 = vmatpush1.bf16.msra.mxu0 %v1340
      %1363 = vmatprep.subr.bf16.mxu0 0
      %1364 = vmatpush1.bf16.msra.mxu0 %v1341
      %1365 = vmatprep.subr.bf16.mxu0 0
      %1366 = vmatpush1.bf16.msra.mxu0 %v1342
      %1367 = vmatprep.subr.bf16.mxu0 0
      %1368 = vmatpush1.bf16.msra.mxu0 0
      %1369 = vmatprep.subr.bf16.mxu0 0
      %1370 = vmatpush1.bf16.msra.mxu0 0
      %1371 = vmatprep.subr.bf16.mxu0 0
      %1372 = vmatpush1.bf16.msra.mxu0 0
      %1373 = vmatprep.subr.bf16.mxu0 0
      %1374 = vmatpush1.bf16.msra.mxu0 0
      %1375 = vmatprep.subr.bf16.mxu0 0
      %1376 = vmatpush1.bf16.msra.mxu0 0
      %1377 = vmatprep.subr.bf16.mxu0 0
      %1378 = vmatpush1.bf16.msra.mxu0 0
      %1379 = vmatprep.subr.bf16.mxu0 0
      %1380 = vmatpush1.bf16.msra.mxu0 0
      %1381 = vmatprep.subr.bf16.mxu0 0
      %1382 = vmatpush1.bf16.msra.mxu0 0
      %1383 = vmatprep.mubr.bf16.mxu0 0
      %1384 = vmatmul.mubr.bf16.gmra.mrb[0].mxu0 %v1270
      %v1385 = vpop.f32.mrb[0].mxu0
      %v1386 = vadd.f32 %v1301, %v1385
      %v1387 = vpop.f32.mrb[0].mxu0
      %v1388 = vpop.f32.mrb[0].mxu0
      %v1389 = vadd.f32 %v1301, %v1388
      %v1390 = vpop.f32.mrb[0].mxu0
      %1391 = vmatprep.mubr.bf16.mxu0 0
      %1392 = vmatmul.mubr.bf16.gmra.mrb[0].mxu0 %v1271
      %v1393 = vpop.f32.mrb[0].mxu0
      %v1394 = vadd.f32 %v1301, %v1393
      %v1395 = vpop.f32.mrb[0].mxu0
      %v1396 = vpop.f32.mrb[0].mxu0
      %v1397 = vadd.f32 %v1301, %v1396
      %v1398 = vpop.f32.mrb[0].mxu0
      %1399 = vmatprep.mubr.bf16.mxu0 0
      %1400 = vmatmul.mubr.bf16.gmra.mrb[0].mxu0 %v1272
      %v1401 = vpop.f32.mrb[0].mxu0
      %v1402 = vadd.f32 %v1301, %v1401
      %v1403 = vpop.f32.mrb[0].mxu0
      %v1404 = vpop.f32.mrb[0].mxu0
      %v1405 = vadd.f32 %v1301, %v1404
      %v1406 = vpop.f32.mrb[0].mxu0
      %1407 = vmatprep.mubr.bf16.mxu0 0
      %1408 = vmatmul.mubr.bf16.gmra.mrb[0].mxu0 %v1273
      %v1409 = vpop.f32.mrb[0].mxu0
      %v1410 = vadd.f32 %v1301, %v1409
      %v1411 = vpop.f32.mrb[0].mxu0
      %v1412 = vpop.f32.mrb[0].mxu0
      %v1413 = vadd.f32 %v1301, %v1412
      %v1414 = vpop.f32.mrb[0].mxu0
      %1415 = vmatprep.mubr.bf16.mxu0 0
      %1416 = vmatmul.mubr.bf16.gmra.mrb[0].mxu0 %v1274
      %v1417 = vpop.f32.mrb[0].mxu0
      %v1418 = vadd.f32 %v1301, %v1417
      %v1419 = vpop.f32.mrb[0].mxu0
      %v1420 = vpop.f32.mrb[0].mxu0
      %v1421 = vadd.f32 %v1301, %v1420
      %v1422 = vpop.f32.mrb[0].mxu0
      %1423 = vmatprep.mubr.bf16.mxu0 0
      %1424 = vmatmul.mubr.bf16.gmra.mrb[0].mxu0 %v1275
      %v1425 = vpop.f32.mrb[0].mxu0
      %v1426 = vadd.f32 %v1301, %v1425
      %v1427 = vpop.f32.mrb[0].mxu0
      %v1428 = vpop.f32.mrb[0].mxu0
      %v1429 = vadd.f32 %v1301, %v1428
      %v1430 = vpop.f32.mrb[0].mxu0
      %1431 = vmatprep.mubr.bf16.mxu0 0
      %1432 = vmatmul.mubr.bf16.gmra.mrb[0].mxu0 %v1276
      %v1433 = vpop.f32.mrb[0].mxu0
      %v1434 = vadd.f32 %v1301, %v1433
      %v1435 = vpop.f32.mrb[0].mxu0
      %v1436 = vpop.f32.mrb[0].mxu0
      %v1437 = vadd.f32 %v1301, %v1436
      %v1438 = vpop.f32.mrb[0].mxu0
      %1439 = vmatprep.mubr.bf16.mxu0 0
      %1440 = vmatmul.mubr.bf16.gmra.mrb[0].mxu0 %v1277
      %v1441 = vpop.f32.mrb[0].mxu0
      %v1442 = vadd.f32 %v1301, %v1441
      %v1443 = vpop.f32.mrb[0].mxu0
      %v1444 = vpop.f32.mrb[0].mxu0
      %v1445 = vadd.f32 %v1301, %v1444
      %v1446 = vpop.f32.mrb[0].mxu0
      %1447 = vmatprep.mubr.bf16.mxu0 0
      %1448 = vmatmul.mubr.bf16.gmra.mrb[0].mxu0 %v1278
      %v1449 = vpop.f32.mrb[0].mxu0
      %v1450 = vadd.f32 %v1301, %v1449
      %v1451 = vpop.f32.mrb[0].mxu0
      %v1452 = vpop.f32.mrb[0].mxu0
      %v1453 = vadd.f32 %v1301, %v1452
      %v1454 = vpop.f32.mrb[0].mxu0
      %1455 = vmatprep.mubr.bf16.mxu0 0
      %1456 = vmatmul.mubr.bf16.gmra.mrb[0].mxu0 %v1279
      %v1457 = vpop.f32.mrb[0].mxu0
      %v1458 = vadd.f32 %v1301, %v1457
      %v1459 = vpop.f32.mrb[0].mxu0
      %v1460 = vpop.f32.mrb[0].mxu0
      %v1461 = vpop.f32.mrb[0].mxu0
      %1462 = vdwg.mxu0
      %v1463 = vpack.c.bf16 %v1389, %v1386
      %v1464 = vpack.c.bf16 %v1397, %v1394
      %v1465 = vpack.c.bf16 %v1405, %v1402
      %v1466 = vpack.c.bf16 %v1413, %v1410
      %v1467 = vpack.c.bf16 %v1421, %v1418
      %v1468 = vpack.c.bf16 %v1429, %v1426
      %v1469 = vpack.c.bf16 %v1437, %v1434
      %v1470 = vpack.c.bf16 %v1445, %v1442
      %v1471 = vpack.c.bf16 %v1453, %v1450
      %v1472 = vpack.c.bf16 %v1458, %v1458
      %v1483 = vunpack.c.l.b16 %v1463
      %v1484 = vunpack.c.h.b16 %v1463
      %v1485 = vunpack.c.l.b16 %v1464
      %v1486 = vunpack.c.h.b16 %v1464
      %v1487 = vunpack.c.l.b16 %v1465
      %v1488 = vunpack.c.h.b16 %v1465
      %v1489 = vunpack.c.l.b16 %v1466
      %v1490 = vunpack.c.h.b16 %v1466
      %v1491 = vunpack.c.l.b16 %v1467
      %v1492 = vunpack.c.h.b16 %v1467
      %v1493 = vunpack.c.l.b16 %v1468
      %v1494 = vunpack.c.h.b16 %v1468
      %v1495 = vunpack.c.l.b16 %v1469
      %v1496 = vunpack.c.h.b16 %v1469
      %v1497 = vunpack.c.l.b16 %v1470
      %v1498 = vunpack.c.h.b16 %v1470
      %v1499 = vunpack.c.l.b16 %v1471
      %v1500 = vunpack.c.h.b16 %v1471
      %v1501 = vunpack.c.l.b16 %v1472
      %v1502 = vpack.c.b16 %v1483, %v1483
      %v1503 = vpack.c.b16 %v1484, %v1484
      %v1504 = vpack.c.b16 %v1485, %v1485
      %v1505 = vpack.c.b16 %v1486, %v1486
      %v1506 = vpack.c.b16 %v1487, %v1487
      %v1507 = vpack.c.b16 %v1488, %v1488
      %v1508 = vpack.c.b16 %v1489, %v1489
      %v1509 = vpack.c.b16 %v1490, %v1490
      %v1510 = vpack.c.b16 %v1491, %v1491
      %v1511 = vpack.c.b16 %v1492, %v1492
      %v1512 = vpack.c.b16 %v1493, %v1493
      %v1513 = vpack.c.b16 %v1494, %v1494
      %v1514 = vpack.c.b16 %v1495, %v1495
      %v1515 = vpack.c.b16 %v1496, %v1496
      %v1516 = vpack.c.b16 %v1497, %v1497
      %v1517 = vpack.c.b16 %v1498, %v1498
      %v1518 = vpack.c.b16 %v1499, %v1499
      %v1519 = vpack.c.b16 %v1500, %v1500
      %v1520 = vpack.c.b16 %v1501, %v1501
      %vm1540 = vcmask 27648
      %1541 = vst.msk [vmem:[%s334] sm:$0xf] %vm1540, %v1502
      %1542 = vst.msk [vmem:[%s334 + $0x4] sm:$0xf] %vm1540, %v1503
      %1543 = vst.msk [vmem:[%s334 + $0x8] sm:$0xf] %vm1540, %v1504
      %1544 = vst.msk [vmem:[%s334 + $0xc] sm:$0xf] %vm1540, %v1505
      %1545 = vst.msk [vmem:[%s334 + $0x10] sm:$0xf] %vm1540, %v1506
      %1546 = vst.msk [vmem:[%s334 + $0x14] sm:$0xf] %vm1540, %v1507
      %1547 = vst.msk [vmem:[%s334 + $0x18] sm:$0xf] %vm1540, %v1508
      %1548 = vst.msk [vmem:[%s334 + $0x1c] sm:$0xf] %vm1540, %v1509
      %1549 = vst.msk [vmem:[%s334 + $0x20] sm:$0xf] %vm1540, %v1510
      %1550 = vst.msk [vmem:[%s334 + $0x24] sm:$0xf] %vm1540, %v1511
      %1551 = vst.msk [vmem:[%s334 + $0x28] sm:$0xf] %vm1540, %v1512
      %1552 = vst.msk [vmem:[%s334 + $0x2c] sm:$0xf] %vm1540, %v1513
      %1553 = vst.msk [vmem:[%s334 + $0x30] sm:$0xf] %vm1540, %v1514
      %1554 = vst.msk [vmem:[%s334 + $0x34] sm:$0xf] %vm1540, %v1515
      %1555 = vst.msk [vmem:[%s334 + $0x38] sm:$0xf] %vm1540, %v1516
      %1556 = vst.msk [vmem:[%s334 + $0x3c] sm:$0xf] %vm1540, %v1517
      %1557 = vst.msk [vmem:[%s334 + $0x40] sm:$0xf] %vm1540, %v1518
      %1558 = vst.msk [vmem:[%s334 + $0x44] sm:$0xf] %vm1540, %v1519
      %1559 = vst.msk [vmem:[%s334 + $0x48] sm:$0xf] %vm1540, %v1520
      %s1560 = smul.u32 19, %s20
      %p1561 = scmp.lt.s32.totalorder %s1560, 37
      %s1562 = scalar_select %p1561, %s1560, 37
      %s1563 = smul.addr %s1562, 4
      %s1564 = scalar_lea.vmem %s9, %s1563
      // Predicated region
      $region57: #{tpu_custom_call.1} parent=55 // pred_check
        %p1565 = pneg %p232
      $region58: #{tpu_custom_call.1} parent=55 // pred_check_branch
        %1567 = sbr.rel (%p1565) target = $region60
      $region59: #{tpu_custom_call.1} parent=55 // pred_region
        %s1568 = smul.u32 19, %s20
      $region60: #{tpu_custom_call.1} parent=55 // pred_fallthru
        _
    $region56: #{tpu_custom_call.1} parent=5 // pred_fallthru
      _
    %p1569 = scmp.le.s32.totalorder 2, %s15
    // Predicated region
    $region61: #{tpu_custom_call.1} parent=5 // pred_check
      %p1570 = pneg %p1569
    $region62: #{tpu_custom_call.1} parent=5 // pred_check_branch
      %1572 = sbr.rel (%p1570) target = $region64
    $region63: #{tpu_custom_call.1} parent=5 // pred_region
      %s1573 = ssub.s32 %s15, 2
      // Predicated region
      $region65: #{tpu_custom_call.1} parent=63 // pred_check
        %p1574 = pneg %p238
      $region66: #{tpu_custom_call.1} parent=63 // pred_check_branch
        %1576 = sbr.rel (%p1574) target = $region68
      $region67: #{tpu_custom_call.1} parent=63 // pred_region
        %s1577 = smul.u32 19, %s21
        %p1578 = scmp.lt.s32.totalorder %s1577, 37
        %s1579 = scalar_select %p1578, %s1577, 37
        %s1580 = smul.addr %s1579, 4
        %s1581 = scalar_lea.vmem %s9, %s1580
      $region68: #{tpu_custom_call.1} parent=63 // pred_fallthru
        _
    $region64: #{tpu_custom_call.1} parent=5 // pred_fallthru
      _
  $region6: #{tpu_custom_call.1} parent=0 // loop_footer
    %s19 = sadd.s32 1, %s15
  $region7: #{tpu_custom_call.1} parent=0 // loop_footer_branch
    %14 = sbr.rel target = $region3
  $region8: #{tpu_custom_call.1} parent=0 // loop_exit
    _

</llo_original>
